<compile_context>
chip_gen: v7x
topology: tpu7x:2x2x1
jax: 0.10.0
libtpu: 0.0.40
codegen_flags: <defaults>
</compile_context>

<pallas_src>
import math

import jax
import jax.numpy as jnp
from jax import lax
from jax.experimental import pallas as pl
from jax.experimental.pallas import tpu as pltpu

# ------------------------- problem sizes (small, deterministic) ----------------
B = 2            # batch
Hs, Ws = 4, 4    # token grid for the conv view
S = Hs * Ws      # sequence length (token 0 acts as the class token)
D = 32           # hidden dim == layer_final_in_channels == layer_final_out_channels
NH = 4           # attention heads
HD = D // NH     # head dim
MLP = 64         # MLP hidden dim of the encoder block
NC = 10          # number of classes (heads output)
RANK = 4         # lora_rank
EPS = 1e-6       # torchvision ViT LayerNorm eps
SCALE = 1.0 / math.sqrt(HD)
COLS = NH * B * S                # 128 — block-diagonal attention column count
OUT_PAD = 128                    # lane-dense output width (>= NC)


# ------------------------------- in-kernel helpers -----------------------------
def _ln(x, g, b):
    mu = jnp.mean(x, axis=-1, keepdims=True)
    xc = x - mu
    var = jnp.mean(xc * xc, axis=-1, keepdims=True)
    return xc * lax.rsqrt(var + EPS) * g + b


def _erf(z):
    # Abramowitz & Stegun 7.1.26, |err| <= 1.5e-7 — matches PyTorch's exact-erf
    # GELU far better than the tanh form, using only exp/mul/add/where.
    a1, a2, a3, a4, a5 = 0.254829592, -0.284496736, 1.421413741, -1.453152027, 1.061405429
    az = jnp.abs(z)
    t = 1.0 / (1.0 + 0.3275911 * az)
    poly = ((((a5 * t + a4) * t + a3) * t + a2) * t + a1) * t
    e = 1.0 - poly * jnp.exp(-az * az)
    return jnp.where(z >= 0.0, e, -e)


def _gelu_exact(x):
    return 0.5 * x * (1.0 + _erf(x * 0.7071067811865476))


# --------------------------------- fused kernel --------------------------------
# wD_ref   (D, 384)  : [ wqkv 0:96 | wo 96:128 | w1 128:192 | wh_pad 192:320 | 0 ]
# w32_ref  (480, 32) : [ w2 0:64 | w_lora 64:352 | kv head mask 352:480 ]
# wide_ref (152,128) : rows 0..10 = LN/bias vectors (see pack_params),
#                      rows 16:16+B = batch score mask, rows 24:152 = block-sum mat
def fused_vit_kernel(x_ref, patch_ref, wD_ref, w32_ref, wide_ref, out_ref):
    x = x_ref[...]                                          # (B*S, D)

    # ---- unpack packed slabs (static slices, free) ----
    ln1g = wide_ref[0:1, 0:D]
    ln1b = wide_ref[1:2, 0:D]
    bqkv = wide_ref[2:3, 0:3 * D]
    bo = wide_ref[3:4, 0:D]
    ln2g = wide_ref[4:5, 0:D]
    ln2b = wide_ref[5:6, 0:D]
    b1 = wide_ref[6:7, 0:MLP]
    b2 = wide_ref[7:8, 0:D]
    lnfg = wide_ref[8:9, 0:D]
    lnfb = wide_ref[9:10, 0:D]
    bh = wide_ref[10:11, :]                                 # (1, 128), lane-padded
    score_mask = wide_ref[16:16 + B, :]                     # (B, COLS) batch-valid mask
    sum_mat = wide_ref[24:24 + COLS, :]                     # (COLS, COLS) per-(head,batch) sums

    wqkv = wD_ref[:, 0:3 * D]                               # (D, 3D)
    wo = wD_ref[:, 3 * D:4 * D]                             # (D, D)
    w1 = wD_ref[:, 4 * D:4 * D + MLP]                       # (D, MLP)
    wh = wD_ref[:, 4 * D + MLP:4 * D + MLP + OUT_PAD]       # (D, 128)

    w2 = w32_ref[0:MLP, :]                                  # (MLP, D)
    w_lora = w32_ref[MLP:MLP + D * 9, :]                    # (C*9, D) (== 0 at init)
    kv_m = w32_ref[MLP + D * 9:MLP + D * 9 + COLS, :]       # (COLS, D) head-channel mask

    # ---- layer1 = ViT EncoderBlock: LN1 -> MHA -> +x -> LN2 -> MLP -> +y ----
    # K and V need every token row; queries are only needed for the class tokens
    # (everything after attention mixing is row-wise and only token 0 survives).
    h = _ln(x, ln1g, ln1b)
    qkv = jnp.dot(h, wqkv, preferred_element_type=jnp.float32) + bqkv   # (B*S, 3D)
    k = qkv[:, D:2 * D]
    v = qkv[:, 2 * D:3 * D]
    q_cls = jnp.concatenate([qkv[b * S:b * S + 1, 0:D] for b in range(B)], axis=0)  # (B, D)
    x_cls = jnp.concatenate([x[b * S:b * S + 1, :] for b in range(B)], axis=0)      # (B, D)

    # Block-diagonal multi-head attention, both batches in one 128-column slab:
    # column c = h*(B*S) + b*S + j  ->  key/value token (b, j) restricted to head h.
    k_rep = jnp.concatenate([k] * NH, axis=0) * kv_m        # (COLS, D)
    v_rep = jnp.concatenate([v] * NH, axis=0) * kv_m        # (COLS, D)
    s = lax.dot_general(q_cls, k_rep, (((1,), (1,)), ((), ())),
                        preferred_element_type=jnp.float32) * SCALE     # (B, COLS)
    # Row max is taken over all 128 columns (incl. cross-batch ones); subtracting a
    # per-row constant is exact for every per-(head,batch) softmax block and the
    # score magnitudes here are far from under/overflow.
    s = s - jnp.max(s, axis=-1, keepdims=True)
    p = jnp.exp(s) * score_mask                             # zero cross-batch terms exactly
    denom = jnp.dot(p, sum_mat, preferred_element_type=jnp.float32) + (1.0 - score_mask)
    p = p * pl.reciprocal(denom, approx=False)              # exact reciprocal (PyTorch parity)
    ctx = jnp.dot(p, v_rep, preferred_element_type=jnp.float32)         # (B, D), heads merged

    attn = jnp.dot(ctx, wo, preferred_element_type=jnp.float32) + bo
    y = x_cls + attn                                        # residual 1 (cls rows only)

    h2 = _ln(y, ln2g, ln2b)
    z = jnp.dot(h2, w1, preferred_element_type=jnp.float32) + b1
    z = _gelu_exact(z)                                      # PyTorch nn.GELU default (erf)
    z = jnp.dot(z, w2, preferred_element_type=jnp.float32) + b2
    y = y + z                                               # residual 2

    # ---- out += out_app (LoRA residual), class-token row only ----
    # TODO(synk): the original `out += out_app` broadcasts a (B,Cout,H/2,W/2) conv
    # output onto the (B,S,D) token tensor, which is shape-ambiguous as written; we
    # align conv output position (0,0) onto the class-token slot of each batch.
    # Numerically identical here because lora_B is zero-initialized.
    y = y + jnp.dot(patch_ref[...], w_lora, preferred_element_type=jnp.float32)

    # ---- encoder.ln -> heads (Linear), lane-dense padded output ----
    yn = _ln(y, lnfg, lnfb)
    out_ref[...] = jnp.dot(yn, wh, preferred_element_type=jnp.float32) + bh


# --------------------------------- JAX glue -------------------------------------
def pack_params(p):
    """Fold the LoRA rank contraction, precompute attention masks, and pack the many
    tiny tensors into a few lane-dense slabs (done once, off the per-call path)."""
    wqkv = jnp.concatenate([p['wq'], p['wk'], p['wv']], axis=1)          # (D, 3D)
    bqkv = jnp.concatenate([p['bq'], p['bk'], p['bv']], axis=1)          # (1, 3D)
    wa = p['lora_A'].reshape(RANK, D * 9).T                              # (C*9, R)
    wb = p['lora_B'].reshape(D, RANK).T                                  # (R, Cout) == 0
    w_lora = wa @ wb                                                     # (C*9, Cout)
    wh_pad = jnp.pad(p['wh'], ((0, 0), (0, OUT_PAD - NC)))               # (D, 128)
    bh_pad = jnp.pad(p['bh'], ((0, 0), (0, OUT_PAD - NC)))               # (1, 128)

    # (D, 384) lane-packed weight slab: [wqkv | wo | w1 | wh_pad | zero pad]
    wD = jnp.concatenate([wqkv, p['wo'], p['w1'], wh_pad], axis=1)       # (D, 320)
    wD = jnp.pad(wD, ((0, 0), (0, 384 - wD.shape[1])))                   # (D, 384)

    # attention masks (compile-time constants, built on host)
    col = jnp.arange(COLS)
    head_of_col = col // (B * S)
    batch_of_col = (col % (B * S)) // S
    blk_of_col = col // S                                                # unique per (head,batch)
    kv_mask = (head_of_col[:, None] == (jnp.arange(D)[None, :] // HD)).astype(jnp.float32)
    score_mask = (jnp.arange(B)[:, None] == batch_of_col[None, :]).astype(jnp.float32)
    sum_mat = (blk_of_col[:, None] == blk_of_col[None, :]).astype(jnp.float32)

    # (480, 32) slab: [w2 | w_lora | kv head mask]
    w32 = jnp.concatenate([p['w2'], w_lora, kv_mask], axis=0)

    # (152, 128) slab: LN/bias rows, score mask, block-sum matrix
    def row(v):
        return jnp.pad(v, ((0, 0), (0, 128 - v.shape[1])))
    vec_rows = jnp.concatenate(
        [row(p['ln1_g']), row(p['ln1_b']), row(bqkv), row(p['bo']),
         row(p['ln2_g']), row(p['ln2_b']), row(p['b1']), row(p['b2']),
         row(p['lnf_g']), row(p['lnf_b']), bh_pad,
         jnp.zeros((5, 128), jnp.float32)], axis=0)                      # (16, 128)
    score_rows = jnp.pad(score_mask, ((0, 8 - B), (0, 0)))               # (8, 128)
    wide = jnp.concatenate([vec_rows, score_rows, sum_mat], axis=0)      # (152, 128)

    return dict(wD=wD, w32=w32, wide=wide)


def model_forward(feat, pk):
    feat = lax.stop_gradient(feat)                # out = feat.detach()
    Bb, Ss, Dd = feat.shape
    x2d = feat.reshape(Bb * Ss, Dd)               # flattened tokens for row-wise ops

    # im2col patch for conv3x3/stride2/pad1 at output position (0,0) only — the
    # only conv token that reaches the class-token slot (see TODO in the kernel).
    x_img = feat.transpose(0, 2, 1).reshape(Bb, Dd, Hs, Ws)
    xp = jnp.pad(x_img, ((0, 0), (0, 0), (1, 1), (1, 1)))
    patch_cls = xp[:, :, 0:3, 0:3].reshape(Bb, Dd * 9)      # (B, C*9), order c*9+kh*3+kw

    vm = pltpu.MemorySpace.VMEM
    logits_pad = pl.pallas_call(
        fused_vit_kernel,
        out_shape=jax.ShapeDtypeStruct((Bb, OUT_PAD), jnp.float32),
        in_specs=[pl.BlockSpec(memory_space=vm)] * 5,
        out_specs=pl.BlockSpec(memory_space=vm),
        compiler_params=pltpu.CompilerParams(vmem_limit_bytes=4 * 1024 * 1024),
        cost_estimate=pl.CostEstimate(flops=400_000, transcendentals=768,
                                      bytes_accessed=196_000),
    )(x2d, patch_cls, pk['wD'], pk['w32'], pk['wide'])
    return logits_pad[:, :NC]                     # drop lane padding outside the kernel


# ------------------------------ deterministic params ----------------------------
def init_params(key):
    ks = jax.random.split(key, 8)

    def nrm(k, shape, scale=0.02):
        return (scale * jax.random.normal(k, shape)).astype(jnp.float32)

    p = {}
    # LoRA convs (PyTorch OIHW); lora_B zero-init exactly as in the module.
    p['lora_A'] = nrm(ks[0], (RANK, D, 3, 3))
    p['lora_B'] = jnp.zeros((D, RANK, 1, 1), jnp.float32)
    # Encoder block (layer1)
    p['ln1_g'] = jnp.ones((1, D), jnp.float32)
    p['ln1_b'] = jnp.zeros((1, D), jnp.float32)
    p['wq'] = nrm(ks[1], (D, D)); p['bq'] = jnp.zeros((1, D), jnp.float32)
    p['wk'] = nrm(ks[2], (D, D)); p['bk'] = jnp.zeros((1, D), jnp.float32)
    p['wv'] = nrm(ks[3], (D, D)); p['bv'] = jnp.zeros((1, D), jnp.float32)
    p['wo'] = nrm(ks[4], (D, D)); p['bo'] = jnp.zeros((1, D), jnp.float32)
    p['ln2_g'] = jnp.ones((1, D), jnp.float32)
    p['ln2_b'] = jnp.zeros((1, D), jnp.float32)
    p['w1'] = nrm(ks[5], (D, MLP)); p['b1'] = jnp.zeros((1, MLP), jnp.float32)
    p['w2'] = nrm(ks[6], (MLP, D)); p['b2'] = jnp.zeros((1, D), jnp.float32)
    # encoder.ln and heads
    p['lnf_g'] = jnp.ones((1, D), jnp.float32)
    p['lnf_b'] = jnp.zeros((1, D), jnp.float32)
    p['wh'] = nrm(ks[7], (D, NC)); p['bh'] = jnp.zeros((1, NC), jnp.float32)
    return p


if __name__ == "__main__":
    key = jax.random.PRNGKey(0)
    kf, kp = jax.random.split(key)
    feat = jax.random.normal(kf, (B, S, D), jnp.float32)
    params = init_params(kp)
    packed = pack_params(params)            # one-time packing, off the per-call path

    out = jax.jit(model_forward)(feat, packed)
    out = jax.block_until_ready(out)
    assert out.shape == (B, NC) and bool(jnp.all(jnp.isfinite(out)))
    print("KERNEL_OK")
</pallas_src>

<mosaic_0001>
module attributes {stable_mosaic.version = 11 : i64} {
  func.func @fused_vit_kernel(%arg0: memref<32x32xf32, #tpu.memory_space<vmem>>, %arg1: memref<2x288xf32, #tpu.memory_space<vmem>>, %arg2: memref<32x384xf32, #tpu.memory_space<vmem>>, %arg3: memref<480x32xf32, #tpu.memory_space<vmem>>, %arg4: memref<152x128xf32, #tpu.memory_space<vmem>>, %arg5: memref<2x128xf32, #tpu.memory_space<vmem>>) attributes {dimension_semantics = [], scalar_prefetch = 0 : i64, scratch_operands = 0 : i64, tpu.core_type = #tpu.core_type<tc>} {
    %c0 = arith.constant 0 : index
    %c0_0 = arith.constant 0 : index
    %0 = vector.load %arg0[%c0, %c0_0] : memref<32x32xf32, #tpu.memory_space<vmem>>, vector<32x32xf32>
    %c0_1 = arith.constant 0 : index
    %c0_2 = arith.constant 0 : index
    %1 = vector.load %arg4[%c0_1, %c0_2] : memref<152x128xf32, #tpu.memory_space<vmem>>, vector<1x32xf32>
    %c1 = arith.constant 1 : index
    %c0_3 = arith.constant 0 : index
    %2 = vector.load %arg4[%c1, %c0_3] : memref<152x128xf32, #tpu.memory_space<vmem>>, vector<1x32xf32>
    %c2 = arith.constant 2 : index
    %c0_4 = arith.constant 0 : index
    %3 = vector.load %arg4[%c2, %c0_4] : memref<152x128xf32, #tpu.memory_space<vmem>>, vector<1x96xf32>
    %c3 = arith.constant 3 : index
    %c0_5 = arith.constant 0 : index
    %4 = vector.load %arg4[%c3, %c0_5] : memref<152x128xf32, #tpu.memory_space<vmem>>, vector<1x32xf32>
    %c4 = arith.constant 4 : index
    %c0_6 = arith.constant 0 : index
    %5 = vector.load %arg4[%c4, %c0_6] : memref<152x128xf32, #tpu.memory_space<vmem>>, vector<1x32xf32>
    %c5 = arith.constant 5 : index
    %c0_7 = arith.constant 0 : index
    %6 = vector.load %arg4[%c5, %c0_7] : memref<152x128xf32, #tpu.memory_space<vmem>>, vector<1x32xf32>
    %c6 = arith.constant 6 : index
    %c0_8 = arith.constant 0 : index
    %7 = vector.load %arg4[%c6, %c0_8] : memref<152x128xf32, #tpu.memory_space<vmem>>, vector<1x64xf32>
    %c7 = arith.constant 7 : index
    %c0_9 = arith.constant 0 : index
    %8 = vector.load %arg4[%c7, %c0_9] : memref<152x128xf32, #tpu.memory_space<vmem>>, vector<1x32xf32>
    %c8 = arith.constant 8 : index
    %c0_10 = arith.constant 0 : index
    %9 = vector.load %arg4[%c8, %c0_10] : memref<152x128xf32, #tpu.memory_space<vmem>>, vector<1x32xf32>
    %c9 = arith.constant 9 : index
    %c0_11 = arith.constant 0 : index
    %10 = vector.load %arg4[%c9, %c0_11] : memref<152x128xf32, #tpu.memory_space<vmem>>, vector<1x32xf32>
    %c10 = arith.constant 10 : index
    %c0_12 = arith.constant 0 : index
    %11 = vector.load %arg4[%c10, %c0_12] : memref<152x128xf32, #tpu.memory_space<vmem>>, vector<1x128xf32>
    %c16 = arith.constant 16 : index
    %c0_13 = arith.constant 0 : index
    %12 = vector.load %arg4[%c16, %c0_13] : memref<152x128xf32, #tpu.memory_space<vmem>>, vector<2x128xf32>
    %c24 = arith.constant 24 : index
    %c0_14 = arith.constant 0 : index
    %13 = vector.load %arg4[%c24, %c0_14] : memref<152x128xf32, #tpu.memory_space<vmem>>, vector<128x128xf32>
    %c0_15 = arith.constant 0 : index
    %c0_16 = arith.constant 0 : index
    %14 = vector.load %arg2[%c0_15, %c0_16] : memref<32x384xf32, #tpu.memory_space<vmem>>, vector<32x96xf32>
    %c0_17 = arith.constant 0 : index
    %c96 = arith.constant 96 : index
    %15 = vector.load %arg2[%c0_17, %c96] : memref<32x384xf32, #tpu.memory_space<vmem>>, vector<32x32xf32>
    %c0_18 = arith.constant 0 : index
    %c128 = arith.constant 128 : index
    %16 = vector.load %arg2[%c0_18, %c128] : memref<32x384xf32, #tpu.memory_space<vmem>>, vector<32x64xf32>
    %c0_19 = arith.constant 0 : index
    %c192 = arith.constant 192 : index
    %17 = vector.load %arg2[%c0_19, %c192] : memref<32x384xf32, #tpu.memory_space<vmem>>, vector<32x128xf32>
    %c0_20 = arith.constant 0 : index
    %c0_21 = arith.constant 0 : index
    %18 = vector.load %arg3[%c0_20, %c0_21] : memref<480x32xf32, #tpu.memory_space<vmem>>, vector<64x32xf32>
    %c64 = arith.constant 64 : index
    %c0_22 = arith.constant 0 : index
    %19 = vector.load %arg3[%c64, %c0_22] : memref<480x32xf32, #tpu.memory_space<vmem>>, vector<288x32xf32>
    %c352 = arith.constant 352 : index
    %c0_23 = arith.constant 0 : index
    %20 = vector.load %arg3[%c352, %c0_23] : memref<480x32xf32, #tpu.memory_space<vmem>>, vector<128x32xf32>
    %cst = arith.constant dense<0.000000e+00> : vector<32xf32>
    %21 = vector.multi_reduction <add>, %0, %cst [1] : vector<32x32xf32> to vector<32xf32>
    %22 = vector.shape_cast %21 : vector<32xf32> to vector<32x1xf32>
    %cst_24 = arith.constant 3.200000e+01 : f32
    %23 = vector.broadcast %cst_24 : f32 to vector<32x1xf32>
    %24 = arith.divf %22, %23 : vector<32x1xf32>
    %25 = vector.broadcast %24 : vector<32x1xf32> to vector<32x32xf32>
    %26 = arith.subf %0, %25 : vector<32x32xf32>
    %27 = arith.mulf %26, %26 : vector<32x32xf32>
    %cst_25 = arith.constant dense<0.000000e+00> : vector<32xf32>
    %28 = vector.multi_reduction <add>, %27, %cst_25 [1] : vector<32x32xf32> to vector<32xf32>
    %29 = vector.shape_cast %28 : vector<32xf32> to vector<32x1xf32>
    %cst_26 = arith.constant 3.200000e+01 : f32
    %30 = vector.broadcast %cst_26 : f32 to vector<32x1xf32>
    %31 = arith.divf %29, %30 : vector<32x1xf32>
    %cst_27 = arith.constant 9.99999997E-7 : f32
    %32 = vector.broadcast %cst_27 : f32 to vector<32x1xf32>
    %33 = arith.addf %31, %32 : vector<32x1xf32>
    %34 = math.rsqrt %33 : vector<32x1xf32>
    %35 = vector.broadcast %34 : vector<32x1xf32> to vector<32x32xf32>
    %36 = arith.mulf %26, %35 : vector<32x32xf32>
    %37 = vector.broadcast %1 : vector<1x32xf32> to vector<32x32xf32>
    %38 = arith.mulf %36, %37 : vector<32x32xf32>
    %39 = vector.broadcast %2 : vector<1x32xf32> to vector<32x32xf32>
    %40 = arith.addf %38, %39 : vector<32x32xf32>
    %cst_28 = arith.constant dense<0.000000e+00> : vector<32x96xf32>
    %41 = tpu.matmul %40, %14, %cst_28 {dimension_numbers = #tpu.dot_dimension_numbers<[1], [0], [0], [1], [0, 0, 1, 1], [], []>} : vector<32x32xf32>, vector<32x96xf32>, vector<32x96xf32> -> vector<32x96xf32>
    %42 = vector.broadcast %3 : vector<1x96xf32> to vector<32x96xf32>
    %43 = arith.addf %41, %42 : vector<32x96xf32>
    %44 = vector.extract_strided_slice %43 {offsets = [0, 32], sizes = [32, 32], strides = [1, 1]} : vector<32x96xf32> to vector<32x32xf32>
    %45 = vector.extract_strided_slice %43 {offsets = [0, 64], sizes = [32, 32], strides = [1, 1]} : vector<32x96xf32> to vector<32x32xf32>
    %46 = vector.extract_strided_slice %43 {offsets = [0, 0], sizes = [1, 32], strides = [1, 1]} : vector<32x96xf32> to vector<1x32xf32>
    %47 = vector.extract_strided_slice %43 {offsets = [16, 0], sizes = [1, 32], strides = [1, 1]} : vector<32x96xf32> to vector<1x32xf32>
    %48 = tpu.concatenate %46, %47 in 0 : vector<1x32xf32>, vector<1x32xf32> -> vector<2x32xf32>
    %49 = vector.extract_strided_slice %0 {offsets = [0, 0], sizes = [1, 32], strides = [1, 1]} : vector<32x32xf32> to vector<1x32xf32>
    %50 = vector.extract_strided_slice %0 {offsets = [16, 0], sizes = [1, 32], strides = [1, 1]} : vector<32x32xf32> to vector<1x32xf32>
    %51 = tpu.concatenate %49, %50 in 0 : vector<1x32xf32>, vector<1x32xf32> -> vector<2x32xf32>
    %52 = tpu.concatenate %44, %44, %44, %44 in 0 : vector<32x32xf32>, vector<32x32xf32>, vector<32x32xf32>, vector<32x32xf32> -> vector<128x32xf32>
    %53 = arith.mulf %52, %20 : vector<128x32xf32>
    %54 = tpu.concatenate %45, %45, %45, %45 in 0 : vector<32x32xf32>, vector<32x32xf32>, vector<32x32xf32>, vector<32x32xf32> -> vector<128x32xf32>
    %55 = arith.mulf %54, %20 : vector<128x32xf32>
    %cst_29 = arith.constant dense<0.000000e+00> : vector<2x128xf32>
    %56 = tpu.matmul %48, %53, %cst_29 {dimension_numbers = #tpu.dot_dimension_numbers<[1], [1], [0], [0], [0, 0, 1, 0], [], []>} : vector<2x32xf32>, vector<128x32xf32>, vector<2x128xf32> -> vector<2x128xf32>
    %cst_30 = arith.constant 0.353553385 : f32
    %57 = vector.broadcast %cst_30 : f32 to vector<2x128xf32>
    %58 = arith.mulf %56, %57 : vector<2x128xf32>
    %cst_31 = arith.constant dense<0xFF800000> : vector<2xf32>
    %59 = vector.multi_reduction <maximumf>, %58, %cst_31 [1] : vector<2x128xf32> to vector<2xf32>
    %60 = vector.shape_cast %59 : vector<2xf32> to vector<2x1xf32>
    %61 = vector.broadcast %60 : vector<2x1xf32> to vector<2x128xf32>
    %62 = arith.subf %58, %61 : vector<2x128xf32>
    %63 = math.exp %62 : vector<2x128xf32>
    %64 = arith.mulf %63, %12 : vector<2x128xf32>
    %cst_32 = arith.constant dense<0.000000e+00> : vector<2x128xf32>
    %65 = tpu.matmul %64, %13, %cst_32 {dimension_numbers = #tpu.dot_dimension_numbers<[1], [0], [0], [1], [0, 0, 1, 1], [], []>} : vector<2x128xf32>, vector<128x128xf32>, vector<2x128xf32> -> vector<2x128xf32>
    %cst_33 = arith.constant 1.000000e+00 : f32
    %66 = vector.broadcast %cst_33 : f32 to vector<2x128xf32>
    %67 = arith.subf %66, %12 : vector<2x128xf32>
    %68 = arith.addf %65, %67 : vector<2x128xf32>
    %69 = tpu.reciprocal %68 : vector<2x128xf32> -> vector<2x128xf32>
    %70 = arith.mulf %64, %69 : vector<2x128xf32>
    %cst_34 = arith.constant dense<0.000000e+00> : vector<2x32xf32>
    %71 = tpu.matmul %70, %55, %cst_34 {dimension_numbers = #tpu.dot_dimension_numbers<[1], [0], [0], [1], [0, 0, 1, 1], [], []>} : vector<2x128xf32>, vector<128x32xf32>, vector<2x32xf32> -> vector<2x32xf32>
    %cst_35 = arith.constant dense<0.000000e+00> : vector<2x32xf32>
    %72 = tpu.matmul %71, %15, %cst_35 {dimension_numbers = #tpu.dot_dimension_numbers<[1], [0], [0], [1], [0, 0, 1, 1], [], []>} : vector<2x32xf32>, vector<32x32xf32>, vector<2x32xf32> -> vector<2x32xf32>
    %73 = vector.broadcast %4 : vector<1x32xf32> to vector<2x32xf32>
    %74 = arith.addf %72, %73 : vector<2x32xf32>
    %75 = arith.addf %51, %74 : vector<2x32xf32>
    %cst_36 = arith.constant dense<0.000000e+00> : vector<2xf32>
    %76 = vector.multi_reduction <add>, %75, %cst_36 [1] : vector<2x32xf32> to vector<2xf32>
    %77 = vector.shape_cast %76 : vector<2xf32> to vector<2x1xf32>
    %cst_37 = arith.constant 3.200000e+01 : f32
    %78 = vector.broadcast %cst_37 : f32 to vector<2x1xf32>
    %79 = arith.divf %77, %78 : vector<2x1xf32>
    %80 = vector.broadcast %79 : vector<2x1xf32> to vector<2x32xf32>
    %81 = arith.subf %75, %80 : vector<2x32xf32>
    %82 = arith.mulf %81, %81 : vector<2x32xf32>
    %cst_38 = arith.constant dense<0.000000e+00> : vector<2xf32>
    %83 = vector.multi_reduction <add>, %82, %cst_38 [1] : vector<2x32xf32> to vector<2xf32>
    %84 = vector.shape_cast %83 : vector<2xf32> to vector<2x1xf32>
    %cst_39 = arith.constant 3.200000e+01 : f32
    %85 = vector.broadcast %cst_39 : f32 to vector<2x1xf32>
    %86 = arith.divf %84, %85 : vector<2x1xf32>
    %cst_40 = arith.constant 9.99999997E-7 : f32
    %87 = vector.broadcast %cst_40 : f32 to vector<2x1xf32>
    %88 = arith.addf %86, %87 : vector<2x1xf32>
    %89 = math.rsqrt %88 : vector<2x1xf32>
    %90 = vector.broadcast %89 : vector<2x1xf32> to vector<2x32xf32>
    %91 = arith.mulf %81, %90 : vector<2x32xf32>
    %92 = vector.broadcast %5 : vector<1x32xf32> to vector<2x32xf32>
    %93 = arith.mulf %91, %92 : vector<2x32xf32>
    %94 = vector.broadcast %6 : vector<1x32xf32> to vector<2x32xf32>
    %95 = arith.addf %93, %94 : vector<2x32xf32>
    %cst_41 = arith.constant dense<0.000000e+00> : vector<2x64xf32>
    %96 = tpu.matmul %95, %16, %cst_41 {dimension_numbers = #tpu.dot_dimension_numbers<[1], [0], [0], [1], [0, 0, 1, 1], [], []>} : vector<2x32xf32>, vector<32x64xf32>, vector<2x64xf32> -> vector<2x64xf32>
    %97 = vector.broadcast %7 : vector<1x64xf32> to vector<2x64xf32>
    %98 = arith.addf %96, %97 : vector<2x64xf32>
    %cst_42 = arith.constant 5.000000e-01 : f32
    %99 = vector.broadcast %cst_42 : f32 to vector<2x64xf32>
    %100 = arith.mulf %99, %98 : vector<2x64xf32>
    %cst_43 = arith.constant 0.707106769 : f32
    %101 = vector.broadcast %cst_43 : f32 to vector<2x64xf32>
    %102 = arith.mulf %98, %101 : vector<2x64xf32>
    %103 = math.absf %102 : vector<2x64xf32>
    %cst_44 = arith.constant 0.327591091 : f32
    %104 = vector.broadcast %cst_44 : f32 to vector<2x64xf32>
    %105 = arith.mulf %104, %103 : vector<2x64xf32>
    %cst_45 = arith.constant 1.000000e+00 : f32
    %106 = vector.broadcast %cst_45 : f32 to vector<2x64xf32>
    %107 = arith.addf %106, %105 : vector<2x64xf32>
    %cst_46 = arith.constant 1.000000e+00 : f32
    %108 = vector.broadcast %cst_46 : f32 to vector<2x64xf32>
    %109 = arith.divf %108, %107 : vector<2x64xf32>
    %cst_47 = arith.constant 1.06140542 : f32
    %110 = vector.broadcast %cst_47 : f32 to vector<2x64xf32>
    %111 = arith.mulf %110, %109 : vector<2x64xf32>
    %cst_48 = arith.constant -1.45315206 : f32
    %112 = vector.broadcast %cst_48 : f32 to vector<2x64xf32>
    %113 = arith.addf %111, %112 : vector<2x64xf32>
    %114 = arith.mulf %113, %109 : vector<2x64xf32>
    %cst_49 = arith.constant 1.42141378 : f32
    %115 = vector.broadcast %cst_49 : f32 to vector<2x64xf32>
    %116 = arith.addf %114, %115 : vector<2x64xf32>
    %117 = arith.mulf %116, %109 : vector<2x64xf32>
    %cst_50 = arith.constant -0.284496725 : f32
    %118 = vector.broadcast %cst_50 : f32 to vector<2x64xf32>
    %119 = arith.addf %117, %118 : vector<2x64xf32>
    %120 = arith.mulf %119, %109 : vector<2x64xf32>
    %cst_51 = arith.constant 0.254829586 : f32
    %121 = vector.broadcast %cst_51 : f32 to vector<2x64xf32>
    %122 = arith.addf %120, %121 : vector<2x64xf32>
    %123 = arith.mulf %122, %109 : vector<2x64xf32>
    %cst_52 = arith.constant 0.000000e+00 : f32
    %124 = vector.broadcast %cst_52 : f32 to vector<2x64xf32>
    %125 = arith.subf %124, %103 : vector<2x64xf32>
    %126 = arith.mulf %125, %103 : vector<2x64xf32>
    %127 = math.exp %126 : vector<2x64xf32>
    %128 = arith.mulf %123, %127 : vector<2x64xf32>
    %cst_53 = arith.constant 1.000000e+00 : f32
    %129 = vector.broadcast %cst_53 : f32 to vector<2x64xf32>
    %130 = arith.subf %129, %128 : vector<2x64xf32>
    %cst_54 = arith.constant 0.000000e+00 : f32
    %131 = vector.broadcast %cst_54 : f32 to vector<2x64xf32>
    %132 = arith.cmpf oge, %102, %131 : vector<2x64xf32>
    %cst_55 = arith.constant 0.000000e+00 : f32
    %133 = vector.broadcast %cst_55 : f32 to vector<2x64xf32>
    %134 = arith.subf %133, %130 : vector<2x64xf32>
    %135 = arith.select %132, %130, %134 : vector<2x64xi1>, vector<2x64xf32>
    %cst_56 = arith.constant 1.000000e+00 : f32
    %136 = vector.broadcast %cst_56 : f32 to vector<2x64xf32>
    %137 = arith.addf %136, %135 : vector<2x64xf32>
    %138 = arith.mulf %100, %137 : vector<2x64xf32>
    %cst_57 = arith.constant dense<0.000000e+00> : vector<2x32xf32>
    %139 = tpu.matmul %138, %18, %cst_57 {dimension_numbers = #tpu.dot_dimension_numbers<[1], [0], [0], [1], [0, 0, 1, 1], [], []>} : vector<2x64xf32>, vector<64x32xf32>, vector<2x32xf32> -> vector<2x32xf32>
    %140 = vector.broadcast %8 : vector<1x32xf32> to vector<2x32xf32>
    %141 = arith.addf %139, %140 : vector<2x32xf32>
    %142 = arith.addf %75, %141 : vector<2x32xf32>
    %c0_58 = arith.constant 0 : index
    %c0_59 = arith.constant 0 : index
    %143 = vector.load %arg1[%c0_58, %c0_59] : memref<2x288xf32, #tpu.memory_space<vmem>>, vector<2x288xf32>
    %cst_60 = arith.constant dense<0.000000e+00> : vector<2x32xf32>
    %144 = tpu.matmul %143, %19, %cst_60 {dimension_numbers = #tpu.dot_dimension_numbers<[1], [0], [0], [1], [0, 0, 1, 1], [], []>} : vector<2x288xf32>, vector<288x32xf32>, vector<2x32xf32> -> vector<2x32xf32>
    %145 = arith.addf %142, %144 : vector<2x32xf32>
    %cst_61 = arith.constant dense<0.000000e+00> : vector<2xf32>
    %146 = vector.multi_reduction <add>, %145, %cst_61 [1] : vector<2x32xf32> to vector<2xf32>
    %147 = vector.shape_cast %146 : vector<2xf32> to vector<2x1xf32>
    %cst_62 = arith.constant 3.200000e+01 : f32
    %148 = vector.broadcast %cst_62 : f32 to vector<2x1xf32>
    %149 = arith.divf %147, %148 : vector<2x1xf32>
    %150 = vector.broadcast %149 : vector<2x1xf32> to vector<2x32xf32>
    %151 = arith.subf %145, %150 : vector<2x32xf32>
    %152 = arith.mulf %151, %151 : vector<2x32xf32>
    %cst_63 = arith.constant dense<0.000000e+00> : vector<2xf32>
    %153 = vector.multi_reduction <add>, %152, %cst_63 [1] : vector<2x32xf32> to vector<2xf32>
    %154 = vector.shape_cast %153 : vector<2xf32> to vector<2x1xf32>
    %cst_64 = arith.constant 3.200000e+01 : f32
    %155 = vector.broadcast %cst_64 : f32 to vector<2x1xf32>
    %156 = arith.divf %154, %155 : vector<2x1xf32>
    %cst_65 = arith.constant 9.99999997E-7 : f32
    %157 = vector.broadcast %cst_65 : f32 to vector<2x1xf32>
    %158 = arith.addf %156, %157 : vector<2x1xf32>
    %159 = math.rsqrt %158 : vector<2x1xf32>
    %160 = vector.broadcast %159 : vector<2x1xf32> to vector<2x32xf32>
    %161 = arith.mulf %151, %160 : vector<2x32xf32>
    %162 = vector.broadcast %9 : vector<1x32xf32> to vector<2x32xf32>
    %163 = arith.mulf %161, %162 : vector<2x32xf32>
    %164 = vector.broadcast %10 : vector<1x32xf32> to vector<2x32xf32>
    %165 = arith.addf %163, %164 : vector<2x32xf32>
    %cst_66 = arith.constant dense<0.000000e+00> : vector<2x128xf32>
    %166 = tpu.matmul %165, %17, %cst_66 {dimension_numbers = #tpu.dot_dimension_numbers<[1], [0], [0], [1], [0, 0, 1, 1], [], []>} : vector<2x32xf32>, vector<32x128xf32>, vector<2x128xf32> -> vector<2x128xf32>
    %167 = vector.broadcast %11 : vector<1x128xf32> to vector<2x128xf32>
    %168 = arith.addf %166, %167 : vector<2x128xf32>
    %c0_67 = arith.constant 0 : index
    %c0_68 = arith.constant 0 : index
    %169 = vector.load %arg5[%c0_67, %c0_68] : memref<2x128xf32, #tpu.memory_space<vmem>>, vector<2x128xf32>
    tpu.vector_store %arg5[%c0_67, %c0_68], %168 {strides = array<i32>} : memref<2x128xf32, #tpu.memory_space<vmem>>, vector<2x128xf32>,
    return
  }
}

</mosaic_0001>

<llo_original>
// kernel: model_forward.1
$region0: #{model_forward.1}
  #allocation0 [shape = 'u32[]', space=smem, size = 0x4, offset = 0x4, fixed_abs, tag = 'smem constant byte address 0x4 - core index']
  #allocation1 [shape = 'u32[144,128]{1,0:T(1,128)}', space=vmem, size = 0x12000, scoped, tag = 'internal scratch']
  %s0 = inlined_call_operand.vmem [shape: f32[32,32], index: 0, kind: input, shape index: {}]
  %s1 = inlined_call_operand.vmem [shape: f32[2,288], index: 1, kind: input, shape index: {}]
  %s2 = inlined_call_operand.vmem [shape: f32[32,384], index: 2, kind: input, shape index: {}]
  %s3 = inlined_call_operand.vmem [shape: f32[480,32], index: 3, kind: input, shape index: {}]
  %s4 = inlined_call_operand.vmem [shape: f32[152,128], index: 4, kind: input, shape index: {}]
  %s5 = inlined_call_operand.hbm [shape: f32[2,128], index: 5, kind: output, shape index: {}]
  %s6 = sld [smem:[#allocation0]]
  $region30: #{model_forward.1} parent=0
    _
  %s8 = ssub.s32 1, %s6
  %s9 = scalar_select 0, %s8, %s6
  $region1: #{model_forward.1} parent=0
    #allocation2 [shape = 'u8[1024]{0}', space=vmem, size = 0x400, scoped, tag = 'output window, operand 0, single buffered']
    #allocation3 [shape = 's32[1]{0}', space=sflag, size = 0x4, scoped, tag = 'scoped memory for model_forward.1']
    %10 = vsyncpa [#allocation3], 0
    // Predicated region
    $region2: #{model_forward.1} parent=1 // pred_check
      _
    $region3: #{model_forward.1} parent=1 // pred_check_branch
      %12 = sbr.rel (0) target = $region5
    $region4: #{model_forward.1} parent=1 // pred_region
      _
    $region5: #{model_forward.1} parent=1 // pred_fallthru
      _
    // Predicated region
    $region6: #{model_forward.1} parent=1 // pred_check
      _
    $region7: #{model_forward.1} parent=1 // pred_check_branch
      %14 = sbr.rel (0) target = $region9
    $region8: #{model_forward.1} parent=1 // pred_region
      _
    $region9: #{model_forward.1} parent=1 // pred_fallthru
      _
    // Predicated region
    $region10: #{model_forward.1} parent=1 // pred_check
      _
    $region11: #{model_forward.1} parent=1 // pred_check_branch
      %16 = sbr.rel (0) target = $region13
    $region12: #{model_forward.1} parent=1 // pred_region
      _
    $region13: #{model_forward.1} parent=1 // pred_fallthru
      _
    // Predicated region
    $region14: #{model_forward.1} parent=1 // pred_check
      _
    $region15: #{model_forward.1} parent=1 // pred_check_branch
      %18 = sbr.rel (0) target = $region17
    $region16: #{model_forward.1} parent=1 // pred_region
      _
    $region17: #{model_forward.1} parent=1 // pred_fallthru
      _
    // Predicated region
    $region18: #{model_forward.1} parent=1 // pred_check
      _
    $region19: #{model_forward.1} parent=1 // pred_check_branch
      %20 = sbr.rel (0) target = $region21
    $region20: #{model_forward.1} parent=1 // pred_region
      _
    $region21: #{model_forward.1} parent=1 // pred_fallthru
      _
    %v21 = vld [vmem:[%s0] sm:$0xff]
    %v22 = vld [vmem:[%s0 + $0x8] sm:$0xff]
    %v23 = vld [vmem:[%s0 + $0x10] sm:$0xff]
    %v24 = vld [vmem:[%s0 + $0x18] sm:$0xff]
    %v25 = vld [vmem:[%s4] sm:$0x1]
    %v26 = vld [vmem:[%s4 + $0x1] sm:$0x1]
    %v27 = vld [vmem:[%s4 + $0x2] sm:$0x1]
    %v28 = vld [vmem:[%s4 + $0x3] sm:$0x1]
    %v29 = vld [vmem:[%s4 + $0x4] sm:$0x1]
    %v30 = vld [vmem:[%s4 + $0x5] sm:$0x1]
    %v31 = vld [vmem:[%s4 + $0x6] sm:$0x1]
    %v32 = vld [vmem:[%s4 + $0x7] sm:$0x1]
    %v33 = vld [vmem:[%s4 + $0x8] sm:$0x1]
    %v34 = vld [vmem:[%s4 + $0x9] sm:$0x1]
    %v35 = vld [vmem:[%s4 + $0xa] sm:$0x1]
    %v36 = vld [vmem:[%s4 + $0x10] sm:$0x3]
    %v37 = vld [vmem:[%s4 + $0x18] sm:$0xff]
    %v38 = vld [vmem:[%s4 + $0x20] sm:$0xff]
    %v39 = vld [vmem:[%s4 + $0x28] sm:$0xff]
    %v40 = vld [vmem:[%s4 + $0x30] sm:$0xff]
    %v41 = vld [vmem:[%s4 + $0x38] sm:$0xff]
    %v42 = vld [vmem:[%s4 + $0x40] sm:$0xff]
    %v43 = vld [vmem:[%s4 + $0x48] sm:$0xff]
    %v44 = vld [vmem:[%s4 + $0x50] sm:$0xff]
    %v45 = vld [vmem:[%s4 + $0x58] sm:$0xff]
    %v46 = vld [vmem:[%s4 + $0x60] sm:$0xff]
    %v47 = vld [vmem:[%s4 + $0x68] sm:$0xff]
    %v48 = vld [vmem:[%s4 + $0x70] sm:$0xff]
    %v49 = vld [vmem:[%s4 + $0x78] sm:$0xff]
    %v50 = vld [vmem:[%s4 + $0x80] sm:$0xff]
    %v51 = vld [vmem:[%s4 + $0x88] sm:$0xff]
    %v52 = vld [vmem:[%s4 + $0x90] sm:$0xff]
    %v53 = vld [vmem:[%s2] sm:$0xff]
    %v54 = vld [vmem:[%s2 + $0x18] sm:$0xff]
    %v55 = vld [vmem:[%s2 + $0x30] sm:$0xff]
    %v56 = vld [vmem:[%s2 + $0x48] sm:$0xff]
    %v57 = vld [vmem:[%s2 + $0x8] sm:$0xff]
    %v58 = vld [vmem:[%s2 + $0x20] sm:$0xff]
    %v59 = vld [vmem:[%s2 + $0x38] sm:$0xff]
    %v60 = vld [vmem:[%s2 + $0x50] sm:$0xff]
    %v61 = vld [vmem:[%s2 + $0x8] sm:$0xff]
    %v62 = vld [vmem:[%s2 + $0x10] sm:$0xff]
    %v63 = vld [vmem:[%s2 + $0x20] sm:$0xff]
    %v64 = vld [vmem:[%s2 + $0x28] sm:$0xff]
    %v65 = vld [vmem:[%s2 + $0x38] sm:$0xff]
    %v66 = vld [vmem:[%s2 + $0x40] sm:$0xff]
    %v67 = vld [vmem:[%s2 + $0x50] sm:$0xff]
    %v68 = vld [vmem:[%s2 + $0x58] sm:$0xff]
    %v69 = vld [vmem:[%s3] sm:$0xff]
    %v70 = vld [vmem:[%s3 + $0x8] sm:$0xff]
    %v71 = vld [vmem:[%s3 + $0x10] sm:$0xff]
    %v72 = vld [vmem:[%s3 + $0x18] sm:$0xff]
    %v73 = vld [vmem:[%s3 + $0x20] sm:$0xff]
    %v74 = vld [vmem:[%s3 + $0x28] sm:$0xff]
    %v75 = vld [vmem:[%s3 + $0x30] sm:$0xff]
    %v76 = vld [vmem:[%s3 + $0x38] sm:$0xff]
    %v77 = vld [vmem:[%s3 + $0x40] sm:$0xff]
    %v78 = vld [vmem:[%s3 + $0x48] sm:$0xff]
    %v79 = vld [vmem:[%s3 + $0x50] sm:$0xff]
    %v80 = vld [vmem:[%s3 + $0x58] sm:$0xff]
    %v81 = vld [vmem:[%s3 + $0x60] sm:$0xff]
    %v82 = vld [vmem:[%s3 + $0x68] sm:$0xff]
    %v83 = vld [vmem:[%s3 + $0x70] sm:$0xff]
    %v84 = vld [vmem:[%s3 + $0x78] sm:$0xff]
    %v85 = vld [vmem:[%s3 + $0x80] sm:$0xff]
    %v86 = vld [vmem:[%s3 + $0x88] sm:$0xff]
    %v87 = vld [vmem:[%s3 + $0x90] sm:$0xff]
    %v88 = vld [vmem:[%s3 + $0x98] sm:$0xff]
    %v89 = vld [vmem:[%s3 + $0xa0] sm:$0xff]
    %v90 = vld [vmem:[%s3 + $0xa8] sm:$0xff]
    %v91 = vld [vmem:[%s3 + $0xb0] sm:$0xff]
    %v92 = vld [vmem:[%s3 + $0xb8] sm:$0xff]
    %v93 = vld [vmem:[%s3 + $0xc0] sm:$0xff]
    %v94 = vld [vmem:[%s3 + $0xc8] sm:$0xff]
    %v95 = vld [vmem:[%s3 + $0xd0] sm:$0xff]
    %v96 = vld [vmem:[%s3 + $0xd8] sm:$0xff]
    %v97 = vld [vmem:[%s3 + $0xe0] sm:$0xff]
    %v98 = vld [vmem:[%s3 + $0xe8] sm:$0xff]
    %v99 = vld [vmem:[%s3 + $0xf0] sm:$0xff]
    %v100 = vld [vmem:[%s3 + $0xf8] sm:$0xff]
    %v101 = vld [vmem:[%s3 + $0x100] sm:$0xff]
    %v102 = vld [vmem:[%s3 + $0x108] sm:$0xff]
    %v103 = vld [vmem:[%s3 + $0x110] sm:$0xff]
    %v104 = vld [vmem:[%s3 + $0x118] sm:$0xff]
    %v105 = vld [vmem:[%s3 + $0x120] sm:$0xff]
    %v106 = vld [vmem:[%s3 + $0x128] sm:$0xff]
    %v107 = vld [vmem:[%s3 + $0x130] sm:$0xff]
    %v108 = vld [vmem:[%s3 + $0x138] sm:$0xff]
    %v109 = vld [vmem:[%s3 + $0x140] sm:$0xff]
    %v110 = vld [vmem:[%s3 + $0x148] sm:$0xff]
    %v111 = vld [vmem:[%s3 + $0x150] sm:$0xff]
    %v112 = vld [vmem:[%s3 + $0x158] sm:$0xff]
    %v113 = vld [vmem:[%s3 + $0x160] sm:$0xff]
    %v114 = vld [vmem:[%s3 + $0x168] sm:$0xff]
    %v115 = vld [vmem:[%s3 + $0x170] sm:$0xff]
    %v116 = vld [vmem:[%s3 + $0x178] sm:$0xff]
    %v117 = vld [vmem:[%s3 + $0x180] sm:$0xff]
    %v118 = vld [vmem:[%s3 + $0x188] sm:$0xff]
    %v119 = vld [vmem:[%s3 + $0x190] sm:$0xff]
    %v120 = vld [vmem:[%s3 + $0x198] sm:$0xff]
    %v121 = vld [vmem:[%s3 + $0x1a0] sm:$0xff]
    %v122 = vld [vmem:[%s3 + $0x1a8] sm:$0xff]
    %v123 = vld [vmem:[%s3 + $0x1b0] sm:$0xff]
    %v124 = vld [vmem:[%s3 + $0x1b8] sm:$0xff]
    %v125 = vld [vmem:[%s3 + $0x1c0] sm:$0xff]
    %v126 = vld [vmem:[%s3 + $0x1c8] sm:$0xff]
    %v127 = vld [vmem:[%s3 + $0x1d0] sm:$0xff]
    %v128 = vld [vmem:[%s3 + $0x1d8] sm:$0xff]
    %vm129 = vcmask 261120
    %v130 = vsel %vm129, %v21, 0.0
    %131 = vadd.xlane.f32.xlu0 %v130
    %v132 = vpop.xlane.xlu0 %131
    %v133 = vsel %vm129, %v22, 0.0
    %134 = vadd.xlane.f32.xlu0 %v133
    %v135 = vpop.xlane.xlu0 %134
    %v136 = vsel %vm129, %v23, 0.0
    %137 = vadd.xlane.f32.xlu0 %v136
    %v138 = vpop.xlane.xlu0 %137
    %v139 = vsel %vm129, %v24, 0.0
    %140 = vadd.xlane.f32.xlu0 %v139
    %v141 = vpop.xlane.xlu0 %140
    %v142 = vrcp.pop 32.0
    %v143 = vmul.f32 %v132, %v142
    %v144 = vmul.f32 %v135, %v142
    %v145 = vmul.f32 %v138, %v142
    %v146 = vmul.f32 %v141, %v142
    %v147 = vsub.f32 %v21, %v143
    %v148 = vsub.f32 %v22, %v144
    %v149 = vsub.f32 %v23, %v145
    %v150 = vsub.f32 %v24, %v146
    %v151 = vmul.f32 %v147, %v147
    %v152 = vmul.f32 %v148, %v148
    %v153 = vmul.f32 %v149, %v149
    %v154 = vmul.f32 %v150, %v150
    %v155 = vsel %vm129, %v151, 0.0
    %156 = vadd.xlane.f32.xlu0 %v155
    %v157 = vpop.xlane.xlu0 %156
    %v158 = vsel %vm129, %v152, 0.0
    %159 = vadd.xlane.f32.xlu0 %v158
    %v160 = vpop.xlane.xlu0 %159
    %v161 = vsel %vm129, %v153, 0.0
    %162 = vadd.xlane.f32.xlu0 %v161
    %v163 = vpop.xlane.xlu0 %162
    %v164 = vsel %vm129, %v154, 0.0
    %165 = vadd.xlane.f32.xlu0 %v164
    %v166 = vpop.xlane.xlu0 %165
    %v167 = vmul.f32 %v157, %v142
    %v168 = vmul.f32 %v160, %v142
    %v169 = vmul.f32 %v163, %v142
    %v170 = vmul.f32 %v166, %v142
    %v171 = vadd.f32 %v167, 1e-06
    %v172 = vadd.f32 %v168, 1e-06
    %v173 = vadd.f32 %v169, 1e-06
    %v174 = vadd.f32 %v170, 1e-06
    %v175 = vrsqrt.pop %v171
    %v176 = vrsqrt.pop %v172
    %v177 = vrsqrt.pop %v173
    %v178 = vrsqrt.pop %v174
    %v179 = vmul.f32 %v147, %v175
    %v180 = vmul.f32 %v148, %v176
    %v181 = vmul.f32 %v149, %v177
    %v182 = vmul.f32 %v150, %v178
    %v183 = vlaneseq
    %v184 = vshrl.u32 %v183, 7
    %v185 = vsub.s32 0, %v184
    %v186 = vrot.slane %v25, %v185
    %v187 = vmul.f32 %v179, %v186
    %v188 = vmul.f32 %v180, %v186
    %v189 = vmul.f32 %v181, %v186
    %v190 = vmul.f32 %v182, %v186
    %v191 = vlaneseq
    %v192 = vshrl.u32 %v191, 7
    %v193 = vsub.s32 0, %v192
    %v194 = vrot.slane %v26, %v193
    %v195 = vadd.f32 %v187, %v194
    %v196 = vadd.f32 %v188, %v194
    %v197 = vadd.f32 %v189, %v194
    %v198 = vadd.f32 %v190, %v194
    %v199 = vlaneseq
    %v200 = vshrl.u32 %v199, 7
    %v201 = vsub.s32 0, %v200
    %v202 = vrot.slane %v27, %v201
    %v204 = vsel %vm129, %v195, 0
    %v207 = vsel %vm129, %v196, 0
    %v210 = vsel %vm129, %v197, 0
    %v213 = vsel %vm129, %v198, 0
    %215 = vmatprep.subr.mxu0 0.0
    %216 = vmatpush1.msra.mxu0 %v53
    %217 = vmatprep.subr.mxu0 0.0
    %218 = vmatpush1.msra.mxu0 %v54
    %219 = vmatprep.subr.mxu0 0.0
    %220 = vmatpush1.msra.mxu0 %v55
    %221 = vmatprep.subr.mxu0 0.0
    %222 = vmatpush1.msra.mxu0 %v56
    %223 = vmatprep.subr.mxu0 0.0
    %224 = vmatpush1.msra.mxu0 0.0
    %225 = vmatprep.subr.mxu0 0.0
    %226 = vmatpush1.msra.mxu0 0.0
    %227 = vmatprep.subr.mxu0 0.0
    %228 = vmatpush1.msra.mxu0 0.0
    %229 = vmatprep.subr.mxu0 0.0
    %230 = vmatpush1.msra.mxu0 0.0
    %231 = vmatprep.subr.mxu0 0.0
    %232 = vmatpush1.msra.mxu0 0.0
    %233 = vmatprep.subr.mxu0 0.0
    %234 = vmatpush1.msra.mxu0 0.0
    %235 = vmatprep.subr.mxu0 0.0
    %236 = vmatpush1.msra.mxu0 0.0
    %237 = vmatprep.subr.mxu0 0.0
    %238 = vmatpush1.msra.mxu0 0.0
    %239 = vmatprep.subr.mxu0 0.0
    %240 = vmatpush1.msra.mxu0 0.0
    %241 = vmatprep.subr.mxu0 0.0
    %242 = vmatpush1.msra.mxu0 0.0
    %243 = vmatprep.subr.mxu0 0.0
    %244 = vmatpush1.msra.mxu0 0.0
    %245 = vmatprep.subr.mxu0 0.0
    %246 = vmatpush1.msra.mxu0 0.0
    %247 = vmatprep.subr.mxu0 0.0
    %248 = vmatpush1.msra.mxu0 0.0
    %249 = vmatprep.subr.mxu0 0.0
    %250 = vmatpush1.msra.mxu0 0.0
    %251 = vmatprep.subr.mxu0 0.0
    %252 = vmatpush1.msra.mxu0 0.0
    %253 = vmatprep.subr.mxu0 0.0
    %254 = vmatpush1.msra.mxu0 0.0
    %255 = vmatprep.subr.mxu0 0.0
    %256 = vmatpush1.msra.mxu0 0.0
    %257 = vmatprep.subr.mxu0 0.0
    %258 = vmatpush1.msra.mxu0 0.0
    %259 = vmatprep.subr.mxu0 0.0
    %260 = vmatpush1.msra.mxu0 0.0
    %261 = vmatprep.subr.mxu0 0.0
    %262 = vmatpush1.msra.mxu0 0.0
    %263 = vmatprep.subr.mxu0 0.0
    %264 = vmatpush1.msra.mxu0 0.0
    %265 = vmatprep.subr.mxu0 0.0
    %266 = vmatpush1.msra.mxu0 0.0
    %267 = vmatprep.subr.mxu0 0.0
    %268 = vmatpush1.msra.mxu0 0.0
    %269 = vmatprep.subr.mxu0 0.0
    %270 = vmatpush1.msra.mxu0 0.0
    %271 = vmatprep.subr.mxu0 0.0
    %272 = vmatpush1.msra.mxu0 0.0
    %273 = vmatprep.subr.mxu0 0.0
    %274 = vmatpush1.msra.mxu0 0.0
    %275 = vmatprep.subr.mxu0 0.0
    %276 = vmatpush1.msra.mxu0 0.0
    %277 = vmatprep.subr.mxu0 0.0
    %278 = vmatpush1.msra.mxu0 0.0
    %279 = vmatprep.mubr.f32.mxu0 0.0
    %280 = vmatmul.mubr.f32.gmra.mrb[0].mxu0 %v204
    %v281 = vpop.f32.mrb[0].mxu0
    %v282 = vadd.f32 %v202, %v281
    %v283 = vpop.f32.mrb[0].mxu0
    %284 = vmatprep.mubr.f32.mxu0 0.0
    %285 = vmatmul.mubr.f32.gmra.mrb[0].mxu0 %v207
    %v286 = vpop.f32.mrb[0].mxu0
    %v287 = vadd.f32 %v202, %v286
    %v288 = vpop.f32.mrb[0].mxu0
    %289 = vmatprep.mubr.f32.mxu0 0.0
    %290 = vmatmul.mubr.f32.gmra.mrb[0].mxu0 %v210
    %v291 = vpop.f32.mrb[0].mxu0
    %v292 = vadd.f32 %v202, %v291
    %v293 = vpop.f32.mrb[0].mxu0
    %294 = vmatprep.mubr.f32.mxu0 0.0
    %295 = vmatmul.mubr.f32.gmra.mrb[0].mxu0 %v213
    %v296 = vpop.f32.mrb[0].mxu0
    %v297 = vadd.f32 %v202, %v296
    %v298 = vpop.f32.mrb[0].mxu0
    %299 = vdwg.mxu0
    %v301 = vrot.slane %v292, 7
    %vm303 = vcmask 1040384
    %v304 = vsel %vm303, %v282, %v301
    %v306 = vrot.slane %v23, 7
    %v308 = vsel %vm303, %v21, %v306
    %325 = vrot.lane.b32.xlu0 %v113, 32
    %v326 = vpop.permute.xlu0 %325
    %327 = vrot.lane.b32.xlu0 %v114, 32
    %v328 = vpop.permute.xlu0 %327
    %329 = vrot.lane.b32.xlu0 %v115, 32
    %v330 = vpop.permute.xlu0 %329
    %331 = vrot.lane.b32.xlu0 %v116, 32
    %v332 = vpop.permute.xlu0 %331
    %333 = vrot.lane.b32.xlu0 %v117, 32
    %v334 = vpop.permute.xlu0 %333
    %335 = vrot.lane.b32.xlu0 %v118, 32
    %v336 = vpop.permute.xlu0 %335
    %337 = vrot.lane.b32.xlu0 %v119, 32
    %v338 = vpop.permute.xlu0 %337
    %339 = vrot.lane.b32.xlu0 %v120, 32
    %v340 = vpop.permute.xlu0 %339
    %341 = vrot.lane.b32.xlu0 %v121, 32
    %v342 = vpop.permute.xlu0 %341
    %343 = vrot.lane.b32.xlu0 %v122, 32
    %v344 = vpop.permute.xlu0 %343
    %345 = vrot.lane.b32.xlu0 %v123, 32
    %v346 = vpop.permute.xlu0 %345
    %347 = vrot.lane.b32.xlu0 %v124, 32
    %v348 = vpop.permute.xlu0 %347
    %349 = vrot.lane.b32.xlu0 %v125, 32
    %v350 = vpop.permute.xlu0 %349
    %351 = vrot.lane.b32.xlu0 %v126, 32
    %v352 = vpop.permute.xlu0 %351
    %353 = vrot.lane.b32.xlu0 %v127, 32
    %v354 = vpop.permute.xlu0 %353
    %355 = vrot.lane.b32.xlu0 %v128, 32
    %v356 = vpop.permute.xlu0 %355
    %v373 = vmul.f32 %v282, %v326
    %v374 = vmul.f32 %v287, %v328
    %v375 = vmul.f32 %v292, %v330
    %v376 = vmul.f32 %v297, %v332
    %v377 = vmul.f32 %v282, %v334
    %v378 = vmul.f32 %v287, %v336
    %v379 = vmul.f32 %v292, %v338
    %v380 = vmul.f32 %v297, %v340
    %v381 = vmul.f32 %v282, %v342
    %v382 = vmul.f32 %v287, %v344
    %v383 = vmul.f32 %v292, %v346
    %v384 = vmul.f32 %v297, %v348
    %v385 = vmul.f32 %v282, %v350
    %v386 = vmul.f32 %v287, %v352
    %v387 = vmul.f32 %v292, %v354
    %v388 = vmul.f32 %v297, %v356
    %389 = vrot.lane.b32.xlu0 %v113, 64
    %v390 = vpop.permute.xlu0 %389
    %391 = vrot.lane.b32.xlu0 %v114, 64
    %v392 = vpop.permute.xlu0 %391
    %393 = vrot.lane.b32.xlu0 %v115, 64
    %v394 = vpop.permute.xlu0 %393
    %395 = vrot.lane.b32.xlu0 %v116, 64
    %v396 = vpop.permute.xlu0 %395
    %397 = vrot.lane.b32.xlu0 %v117, 64
    %v398 = vpop.permute.xlu0 %397
    %399 = vrot.lane.b32.xlu0 %v118, 64
    %v400 = vpop.permute.xlu0 %399
    %401 = vrot.lane.b32.xlu0 %v119, 64
    %v402 = vpop.permute.xlu0 %401
    %403 = vrot.lane.b32.xlu0 %v120, 64
    %v404 = vpop.permute.xlu0 %403
    %405 = vrot.lane.b32.xlu0 %v121, 64
    %v406 = vpop.permute.xlu0 %405
    %407 = vrot.lane.b32.xlu0 %v122, 64
    %v408 = vpop.permute.xlu0 %407
    %409 = vrot.lane.b32.xlu0 %v123, 64
    %v410 = vpop.permute.xlu0 %409
    %411 = vrot.lane.b32.xlu0 %v124, 64
    %v412 = vpop.permute.xlu0 %411
    %413 = vrot.lane.b32.xlu0 %v125, 64
    %v414 = vpop.permute.xlu0 %413
    %415 = vrot.lane.b32.xlu0 %v126, 64
    %v416 = vpop.permute.xlu0 %415
    %417 = vrot.lane.b32.xlu0 %v127, 64
    %v418 = vpop.permute.xlu0 %417
    %419 = vrot.lane.b32.xlu0 %v128, 64
    %v420 = vpop.permute.xlu0 %419
    %v437 = vmul.f32 %v282, %v390
    %v438 = vmul.f32 %v287, %v392
    %v439 = vmul.f32 %v292, %v394
    %v440 = vmul.f32 %v297, %v396
    %v441 = vmul.f32 %v282, %v398
    %v442 = vmul.f32 %v287, %v400
    %v443 = vmul.f32 %v292, %v402
    %v444 = vmul.f32 %v297, %v404
    %v445 = vmul.f32 %v282, %v406
    %v446 = vmul.f32 %v287, %v408
    %v447 = vmul.f32 %v292, %v410
    %v448 = vmul.f32 %v297, %v412
    %v449 = vmul.f32 %v282, %v414
    %v450 = vmul.f32 %v287, %v416
    %v451 = vmul.f32 %v292, %v418
    %v452 = vmul.f32 %v297, %v420
    %469 = vrot.lane.b32.xlu0 %v373, 96
    %v470 = vpop.permute.xlu0 %469
    %471 = vrot.lane.b32.xlu0 %v374, 96
    %v472 = vpop.permute.xlu0 %471
    %473 = vrot.lane.b32.xlu0 %v375, 96
    %v474 = vpop.permute.xlu0 %473
    %475 = vrot.lane.b32.xlu0 %v376, 96
    %v476 = vpop.permute.xlu0 %475
    %477 = vrot.lane.b32.xlu0 %v377, 96
    %v478 = vpop.permute.xlu0 %477
    %479 = vrot.lane.b32.xlu0 %v378, 96
    %v480 = vpop.permute.xlu0 %479
    %481 = vrot.lane.b32.xlu0 %v379, 96
    %v482 = vpop.permute.xlu0 %481
    %483 = vrot.lane.b32.xlu0 %v380, 96
    %v484 = vpop.permute.xlu0 %483
    %485 = vrot.lane.b32.xlu0 %v381, 96
    %v486 = vpop.permute.xlu0 %485
    %487 = vrot.lane.b32.xlu0 %v382, 96
    %v488 = vpop.permute.xlu0 %487
    %489 = vrot.lane.b32.xlu0 %v383, 96
    %v490 = vpop.permute.xlu0 %489
    %491 = vrot.lane.b32.xlu0 %v384, 96
    %v492 = vpop.permute.xlu0 %491
    %493 = vrot.lane.b32.xlu0 %v385, 96
    %v494 = vpop.permute.xlu0 %493
    %495 = vrot.lane.b32.xlu0 %v386, 96
    %v496 = vpop.permute.xlu0 %495
    %497 = vrot.lane.b32.xlu0 %v387, 96
    %v498 = vpop.permute.xlu0 %497
    %499 = vrot.lane.b32.xlu0 %v388, 96
    %v500 = vpop.permute.xlu0 %499
    %v502 = vsel %vm129, %v304, 0
    %v504 = vsel %vm129, %v470, 0
    %v506 = vsel %vm129, %v472, 0
    %v508 = vsel %vm129, %v474, 0
    %v510 = vsel %vm129, %v476, 0
    %v512 = vsel %vm129, %v478, 0
    %v514 = vsel %vm129, %v480, 0
    %v516 = vsel %vm129, %v482, 0
    %v518 = vsel %vm129, %v484, 0
    %v520 = vsel %vm129, %v486, 0
    %v522 = vsel %vm129, %v488, 0
    %v524 = vsel %vm129, %v490, 0
    %v526 = vsel %vm129, %v492, 0
    %v528 = vsel %vm129, %v494, 0
    %v530 = vsel %vm129, %v496, 0
    %v532 = vsel %vm129, %v498, 0
    %v534 = vsel %vm129, %v500, 0
    %536 = vmatprep.subr.mxu0 0.0
    %537 = vmatpush1.xpose.msra.mxu0 %v504
    %538 = vmatprep.subr.mxu0 0.0
    %539 = vmatpush1.xpose.msra.mxu0 %v506
    %540 = vmatprep.subr.mxu0 0.0
    %541 = vmatpush1.xpose.msra.mxu0 %v508
    %542 = vmatprep.subr.mxu0 0.0
    %543 = vmatpush1.xpose.msra.mxu0 %v510
    %544 = vmatprep.subr.mxu0 0.0
    %545 = vmatpush1.xpose.msra.mxu0 %v512
    %546 = vmatprep.subr.mxu0 0.0
    %547 = vmatpush1.xpose.msra.mxu0 %v514
    %548 = vmatprep.subr.mxu0 0.0
    %549 = vmatpush1.xpose.msra.mxu0 %v516
    %550 = vmatprep.subr.mxu0 0.0
    %551 = vmatpush1.xpose.msra.mxu0 %v518
    %552 = vmatprep.subr.mxu0 0.0
    %553 = vmatpush1.xpose.msra.mxu0 %v520
    %554 = vmatprep.subr.mxu0 0.0
    %555 = vmatpush1.xpose.msra.mxu0 %v522
    %556 = vmatprep.subr.mxu0 0.0
    %557 = vmatpush1.xpose.msra.mxu0 %v524
    %558 = vmatprep.subr.mxu0 0.0
    %559 = vmatpush1.xpose.msra.mxu0 %v526
    %560 = vmatprep.subr.mxu0 0.0
    %561 = vmatpush1.xpose.msra.mxu0 %v528
    %562 = vmatprep.subr.mxu0 0.0
    %563 = vmatpush1.xpose.msra.mxu0 %v530
    %564 = vmatprep.subr.mxu0 0.0
    %565 = vmatpush1.xpose.msra.mxu0 %v532
    %566 = vmatprep.subr.mxu0 0.0
    %567 = vmatpush1.xpose.msra.mxu0 %v534
    %568 = vmatprep.subr.mxu0 0.0
    %569 = vmatpush1.xpose.msra.mxu0 0.0
    %570 = vmatprep.subr.mxu0 0.0
    %571 = vmatpush1.xpose.msra.mxu0 0.0
    %572 = vmatprep.subr.mxu0 0.0
    %573 = vmatpush1.xpose.msra.mxu0 0.0
    %574 = vmatprep.subr.mxu0 0.0
    %575 = vmatpush1.xpose.msra.mxu0 0.0
    %576 = vmatprep.subr.mxu0 0.0
    %577 = vmatpush1.xpose.msra.mxu0 0.0
    %578 = vmatprep.subr.mxu0 0.0
    %579 = vmatpush1.xpose.msra.mxu0 0.0
    %580 = vmatprep.subr.mxu0 0.0
    %581 = vmatpush1.xpose.msra.mxu0 0.0
    %582 = vmatprep.subr.mxu0 0.0
    %583 = vmatpush1.xpose.msra.mxu0 0.0
    %584 = vmatprep.subr.mxu0 0.0
    %585 = vmatpush1.xpose.msra.mxu0 0.0
    %586 = vmatprep.subr.mxu0 0.0
    %587 = vmatpush1.xpose.msra.mxu0 0.0
    %588 = vmatprep.subr.mxu0 0.0
    %589 = vmatpush1.xpose.msra.mxu0 0.0
    %590 = vmatprep.subr.mxu0 0.0
    %591 = vmatpush1.xpose.msra.mxu0 0.0
    %592 = vmatprep.subr.mxu0 0.0
    %593 = vmatpush1.xpose.msra.mxu0 0.0
    %594 = vmatprep.subr.mxu0 0.0
    %595 = vmatpush1.xpose.msra.mxu0 0.0
    %596 = vmatprep.subr.mxu0 0.0
    %597 = vmatpush1.xpose.msra.mxu0 0.0
    %598 = vmatprep.subr.mxu0 0.0
    %599 = vmatpush1.xpose.msra.mxu0 0.0
    %600 = vmatprep.mubr.f32.mxu0 0.0
    %601 = vmatmul.mubr.f32.gmra.mrb[0].mxu0 %v502
    %v602 = vpop.f32.mrb[0].mxu0
    %v603 = vadd.f32 0.0, %v602
    %v604 = vpop.f32.mrb[0].mxu0
    %605 = vdwg.mxu0
    %v606 = vmul.f32 %v603, 0.35355338
    %vm607 = vcmask 1041408
    %v608 = vsel %vm607, %v606, -inf
    %609 = vmax.xlane.f32.xlu0 %v608
    %v610 = vpop.xlane.xlu0 %609
    %v611 = vsub.f32 %v606, %v610
    %v612 = vmul.f32 %v611, 1.442695
    %v613 = vpow.pop %v612
    %v614 = vmul.f32 %v613, %v36
    %v615 = vsub.f32 1.0, %v36
    %616 = vmatprep.subr.mxu0 0.0
    %617 = vmatpush1.msra.mxu0 %v37
    %618 = vmatprep.subr.mxu0 0.0
    %619 = vmatpush1.msra.mxu0 %v38
    %620 = vmatprep.subr.mxu0 0.0
    %621 = vmatpush1.msra.mxu0 %v39
    %622 = vmatprep.subr.mxu0 0.0
    %623 = vmatpush1.msra.mxu0 %v40
    %624 = vmatprep.subr.mxu0 0.0
    %625 = vmatpush1.msra.mxu0 %v41
    %626 = vmatprep.subr.mxu0 0.0
    %627 = vmatpush1.msra.mxu0 %v42
    %628 = vmatprep.subr.mxu0 0.0
    %629 = vmatpush1.msra.mxu0 %v43
    %630 = vmatprep.subr.mxu0 0.0
    %631 = vmatpush1.msra.mxu0 %v44
    %632 = vmatprep.subr.mxu0 0.0
    %633 = vmatpush1.msra.mxu0 %v45
    %634 = vmatprep.subr.mxu0 0.0
    %635 = vmatpush1.msra.mxu0 %v46
    %636 = vmatprep.subr.mxu0 0.0
    %637 = vmatpush1.msra.mxu0 %v47
    %638 = vmatprep.subr.mxu0 0.0
    %639 = vmatpush1.msra.mxu0 %v48
    %640 = vmatprep.subr.mxu0 0.0
    %641 = vmatpush1.msra.mxu0 %v49
    %642 = vmatprep.subr.mxu0 0.0
    %643 = vmatpush1.msra.mxu0 %v50
    %644 = vmatprep.subr.mxu0 0.0
    %645 = vmatpush1.msra.mxu0 %v51
    %646 = vmatprep.subr.mxu0 0.0
    %647 = vmatpush1.msra.mxu0 %v52
    %648 = vmatprep.subr.mxu0 0.0
    %649 = vmatpush1.msra.mxu0 0.0
    %650 = vmatprep.subr.mxu0 0.0
    %651 = vmatpush1.msra.mxu0 0.0
    %652 = vmatprep.subr.mxu0 0.0
    %653 = vmatpush1.msra.mxu0 0.0
    %654 = vmatprep.subr.mxu0 0.0
    %655 = vmatpush1.msra.mxu0 0.0
    %656 = vmatprep.subr.mxu0 0.0
    %657 = vmatpush1.msra.mxu0 0.0
    %658 = vmatprep.subr.mxu0 0.0
    %659 = vmatpush1.msra.mxu0 0.0
    %660 = vmatprep.subr.mxu0 0.0
    %661 = vmatpush1.msra.mxu0 0.0
    %662 = vmatprep.subr.mxu0 0.0
    %663 = vmatpush1.msra.mxu0 0.0
    %664 = vmatprep.subr.mxu0 0.0
    %665 = vmatpush1.msra.mxu0 0.0
    %666 = vmatprep.subr.mxu0 0.0
    %667 = vmatpush1.msra.mxu0 0.0
    %668 = vmatprep.subr.mxu0 0.0
    %669 = vmatpush1.msra.mxu0 0.0
    %670 = vmatprep.subr.mxu0 0.0
    %671 = vmatpush1.msra.mxu0 0.0
    %672 = vmatprep.subr.mxu0 0.0
    %673 = vmatpush1.msra.mxu0 0.0
    %674 = vmatprep.subr.mxu0 0.0
    %675 = vmatpush1.msra.mxu0 0.0
    %676 = vmatprep.subr.mxu0 0.0
    %677 = vmatpush1.msra.mxu0 0.0
    %678 = vmatprep.subr.mxu0 0.0
    %679 = vmatpush1.msra.mxu0 0.0
    %680 = vmatprep.mubr.f32.mxu0 0.0
    %681 = vmatmul.mubr.f32.gmra.mrb[0].mxu0 %v614
    %v682 = vpop.f32.mrb[0].mxu0
    %v683 = vadd.f32 %v615, %v682
    %v684 = vpop.f32.mrb[0].mxu0
    %685 = vdwg.mxu0
    %v686 = vrcp.pop %v683
    %v687 = vmul.f32 %v614, %v686
    %704 = vrot.lane.b32.xlu0 %v437, 64
    %v705 = vpop.permute.xlu0 %704
    %706 = vrot.lane.b32.xlu0 %v438, 64
    %v707 = vpop.permute.xlu0 %706
    %708 = vrot.lane.b32.xlu0 %v439, 64
    %v709 = vpop.permute.xlu0 %708
    %710 = vrot.lane.b32.xlu0 %v440, 64
    %v711 = vpop.permute.xlu0 %710
    %712 = vrot.lane.b32.xlu0 %v441, 64
    %v713 = vpop.permute.xlu0 %712
    %714 = vrot.lane.b32.xlu0 %v442, 64
    %v715 = vpop.permute.xlu0 %714
    %716 = vrot.lane.b32.xlu0 %v443, 64
    %v717 = vpop.permute.xlu0 %716
    %718 = vrot.lane.b32.xlu0 %v444, 64
    %v719 = vpop.permute.xlu0 %718
    %720 = vrot.lane.b32.xlu0 %v445, 64
    %v721 = vpop.permute.xlu0 %720
    %722 = vrot.lane.b32.xlu0 %v446, 64
    %v723 = vpop.permute.xlu0 %722
    %724 = vrot.lane.b32.xlu0 %v447, 64
    %v725 = vpop.permute.xlu0 %724
    %726 = vrot.lane.b32.xlu0 %v448, 64
    %v727 = vpop.permute.xlu0 %726
    %728 = vrot.lane.b32.xlu0 %v449, 64
    %v729 = vpop.permute.xlu0 %728
    %730 = vrot.lane.b32.xlu0 %v450, 64
    %v731 = vpop.permute.xlu0 %730
    %732 = vrot.lane.b32.xlu0 %v451, 64
    %v733 = vpop.permute.xlu0 %732
    %734 = vrot.lane.b32.xlu0 %v452, 64
    %v735 = vpop.permute.xlu0 %734
    %752 = vmatprep.subr.mxu0 0.0
    %753 = vmatpush1.msra.mxu0 %v705
    %754 = vmatprep.subr.mxu0 0.0
    %755 = vmatpush1.msra.mxu0 %v707
    %756 = vmatprep.subr.mxu0 0.0
    %757 = vmatpush1.msra.mxu0 %v709
    %758 = vmatprep.subr.mxu0 0.0
    %759 = vmatpush1.msra.mxu0 %v711
    %760 = vmatprep.subr.mxu0 0.0
    %761 = vmatpush1.msra.mxu0 %v713
    %762 = vmatprep.subr.mxu0 0.0
    %763 = vmatpush1.msra.mxu0 %v715
    %764 = vmatprep.subr.mxu0 0.0
    %765 = vmatpush1.msra.mxu0 %v717
    %766 = vmatprep.subr.mxu0 0.0
    %767 = vmatpush1.msra.mxu0 %v719
    %768 = vmatprep.subr.mxu0 0.0
    %769 = vmatpush1.msra.mxu0 %v721
    %770 = vmatprep.subr.mxu0 0.0
    %771 = vmatpush1.msra.mxu0 %v723
    %772 = vmatprep.subr.mxu0 0.0
    %773 = vmatpush1.msra.mxu0 %v725
    %774 = vmatprep.subr.mxu0 0.0
    %775 = vmatpush1.msra.mxu0 %v727
    %776 = vmatprep.subr.mxu0 0.0
    %777 = vmatpush1.msra.mxu0 %v729
    %778 = vmatprep.subr.mxu0 0.0
    %779 = vmatpush1.msra.mxu0 %v731
    %780 = vmatprep.subr.mxu0 0.0
    %781 = vmatpush1.msra.mxu0 %v733
    %782 = vmatprep.subr.mxu0 0.0
    %783 = vmatpush1.msra.mxu0 %v735
    %784 = vmatprep.subr.mxu0 0.0
    %785 = vmatpush1.msra.mxu0 0.0
    %786 = vmatprep.subr.mxu0 0.0
    %787 = vmatpush1.msra.mxu0 0.0
    %788 = vmatprep.subr.mxu0 0.0
    %789 = vmatpush1.msra.mxu0 0.0
    %790 = vmatprep.subr.mxu0 0.0
    %791 = vmatpush1.msra.mxu0 0.0
    %792 = vmatprep.subr.mxu0 0.0
    %793 = vmatpush1.msra.mxu0 0.0
    %794 = vmatprep.subr.mxu0 0.0
    %795 = vmatpush1.msra.mxu0 0.0
    %796 = vmatprep.subr.mxu0 0.0
    %797 = vmatpush1.msra.mxu0 0.0
    %798 = vmatprep.subr.mxu0 0.0
    %799 = vmatpush1.msra.mxu0 0.0
    %800 = vmatprep.subr.mxu0 0.0
    %801 = vmatpush1.msra.mxu0 0.0
    %802 = vmatprep.subr.mxu0 0.0
    %803 = vmatpush1.msra.mxu0 0.0
    %804 = vmatprep.subr.mxu0 0.0
    %805 = vmatpush1.msra.mxu0 0.0
    %806 = vmatprep.subr.mxu0 0.0
    %807 = vmatpush1.msra.mxu0 0.0
    %808 = vmatprep.subr.mxu0 0.0
    %809 = vmatpush1.msra.mxu0 0.0
    %810 = vmatprep.subr.mxu0 0.0
    %811 = vmatpush1.msra.mxu0 0.0
    %812 = vmatprep.subr.mxu0 0.0
    %813 = vmatpush1.msra.mxu0 0.0
    %814 = vmatprep.subr.mxu0 0.0
    %815 = vmatpush1.msra.mxu0 0.0
    %816 = vmatprep.mubr.f32.mxu0 0.0
    %817 = vmatmul.mubr.f32.gmra.mrb[0].mxu0 %v687
    %v818 = vpop.f32.mrb[0].mxu0
    %v819 = vadd.f32 0.0, %v818
    %v820 = vpop.f32.mrb[0].mxu0
    %821 = vdwg.mxu0
    %v822 = vlaneseq
    %v823 = vshrl.u32 %v822, 7
    %v824 = vsub.s32 0, %v823
    %v825 = vrot.slane %v28, %v824
    %830 = vrot.lane.b32.xlu0 %v53, 32
    %v831 = vpop.permute.xlu0 %830
    %832 = vrot.lane.b32.xlu0 %v54, 32
    %v833 = vpop.permute.xlu0 %832
    %834 = vrot.lane.b32.xlu0 %v55, 32
    %v835 = vpop.permute.xlu0 %834
    %836 = vrot.lane.b32.xlu0 %v56, 32
    %v837 = vpop.permute.xlu0 %836
    %v843 = vsel %vm129, %v819, 0
    %845 = vmatprep.subr.mxu0 0.0
    %846 = vmatpush1.msra.mxu0 %v831
    %847 = vmatprep.subr.mxu0 0.0
    %848 = vmatpush1.msra.mxu0 %v833
    %849 = vmatprep.subr.mxu0 0.0
    %850 = vmatpush1.msra.mxu0 %v835
    %851 = vmatprep.subr.mxu0 0.0
    %852 = vmatpush1.msra.mxu0 %v837
    %853 = vmatprep.subr.mxu0 0.0
    %854 = vmatpush1.msra.mxu0 0.0
    %855 = vmatprep.subr.mxu0 0.0
    %856 = vmatpush1.msra.mxu0 0.0
    %857 = vmatprep.subr.mxu0 0.0
    %858 = vmatpush1.msra.mxu0 0.0
    %859 = vmatprep.subr.mxu0 0.0
    %860 = vmatpush1.msra.mxu0 0.0
    %861 = vmatprep.subr.mxu0 0.0
    %862 = vmatpush1.msra.mxu0 0.0
    %863 = vmatprep.subr.mxu0 0.0
    %864 = vmatpush1.msra.mxu0 0.0
    %865 = vmatprep.subr.mxu0 0.0
    %866 = vmatpush1.msra.mxu0 0.0
    %867 = vmatprep.subr.mxu0 0.0
    %868 = vmatpush1.msra.mxu0 0.0
    %869 = vmatprep.subr.mxu0 0.0
    %870 = vmatpush1.msra.mxu0 0.0
    %871 = vmatprep.subr.mxu0 0.0
    %872 = vmatpush1.msra.mxu0 0.0
    %873 = vmatprep.subr.mxu0 0.0
    %874 = vmatpush1.msra.mxu0 0.0
    %875 = vmatprep.subr.mxu0 0.0
    %876 = vmatpush1.msra.mxu0 0.0
    %877 = vmatprep.subr.mxu0 0.0
    %878 = vmatpush1.msra.mxu0 0.0
    %879 = vmatprep.subr.mxu0 0.0
    %880 = vmatpush1.msra.mxu0 0.0
    %881 = vmatprep.subr.mxu0 0.0
    %882 = vmatpush1.msra.mxu0 0.0
    %883 = vmatprep.subr.mxu0 0.0
    %884 = vmatpush1.msra.mxu0 0.0
    %885 = vmatprep.subr.mxu0 0.0
    %886 = vmatpush1.msra.mxu0 0.0
    %887 = vmatprep.subr.mxu0 0.0
    %888 = vmatpush1.msra.mxu0 0.0
    %889 = vmatprep.subr.mxu0 0.0
    %890 = vmatpush1.msra.mxu0 0.0
    %891 = vmatprep.subr.mxu0 0.0
    %892 = vmatpush1.msra.mxu0 0.0
    %893 = vmatprep.subr.mxu0 0.0
    %894 = vmatpush1.msra.mxu0 0.0
    %895 = vmatprep.subr.mxu0 0.0
    %896 = vmatpush1.msra.mxu0 0.0
    %897 = vmatprep.subr.mxu0 0.0
    %898 = vmatpush1.msra.mxu0 0.0
    %899 = vmatprep.subr.mxu0 0.0
    %900 = vmatpush1.msra.mxu0 0.0
    %901 = vmatprep.subr.mxu0 0.0
    %902 = vmatpush1.msra.mxu0 0.0
    %903 = vmatprep.subr.mxu0 0.0
    %904 = vmatpush1.msra.mxu0 0.0
    %905 = vmatprep.subr.mxu0 0.0
    %906 = vmatpush1.msra.mxu0 0.0
    %907 = vmatprep.subr.mxu0 0.0
    %908 = vmatpush1.msra.mxu0 0.0
    %909 = vmatprep.mubr.f32.mxu0 0.0
    %910 = vmatmul.mubr.f32.gmra.mrb[0].mxu0 %v843
    %v911 = vpop.f32.mrb[0].mxu0
    %v912 = vadd.f32 %v825, %v911
    %v913 = vpop.f32.mrb[0].mxu0
    %914 = vdwg.mxu0
    %v915 = vadd.f32 %v308, %v912
    %vm916 = vcmask 254976
    %v917 = vsel %vm916, %v915, 0.0
    %918 = vadd.xlane.f32.xlu0 %v917
    %v919 = vpop.xlane.xlu0 %918
    %v920 = vmul.f32 %v919, %v142
    %v921 = vsub.f32 %v915, %v920
    %v922 = vmul.f32 %v921, %v921
    %v923 = vsel %vm916, %v922, 0.0
    %924 = vadd.xlane.f32.xlu0 %v923
    %v925 = vpop.xlane.xlu0 %924
    %v926 = vmul.f32 %v925, %v142
    %v927 = vadd.f32 %v926, 1e-06
    %v928 = vrsqrt.pop %v927
    %v929 = vmul.f32 %v921, %v928
    %v930 = vlaneseq
    %v931 = vshrl.u32 %v930, 7
    %v932 = vsub.s32 0, %v931
    %v933 = vrot.slane %v29, %v932
    %v934 = vmul.f32 %v929, %v933
    %v935 = vlaneseq
    %v936 = vshrl.u32 %v935, 7
    %v937 = vsub.s32 0, %v936
    %v938 = vrot.slane %v30, %v937
    %v939 = vadd.f32 %v934, %v938
    %v940 = vlaneseq
    %v941 = vshrl.u32 %v940, 7
    %v942 = vsub.s32 0, %v941
    %v943 = vrot.slane %v31, %v942
    %v945 = vsel %vm129, %v939, 0
    %947 = vmatprep.subr.mxu0 0.0
    %948 = vmatpush1.msra.mxu0 %v57
    %949 = vmatprep.subr.mxu0 0.0
    %950 = vmatpush1.msra.mxu0 %v58
    %951 = vmatprep.subr.mxu0 0.0
    %952 = vmatpush1.msra.mxu0 %v59
    %953 = vmatprep.subr.mxu0 0.0
    %954 = vmatpush1.msra.mxu0 %v60
    %955 = vmatprep.subr.mxu0 0.0
    %956 = vmatpush1.msra.mxu0 0.0
    %957 = vmatprep.subr.mxu0 0.0
    %958 = vmatpush1.msra.mxu0 0.0
    %959 = vmatprep.subr.mxu0 0.0
    %960 = vmatpush1.msra.mxu0 0.0
    %961 = vmatprep.subr.mxu0 0.0
    %962 = vmatpush1.msra.mxu0 0.0
    %963 = vmatprep.subr.mxu0 0.0
    %964 = vmatpush1.msra.mxu0 0.0
    %965 = vmatprep.subr.mxu0 0.0
    %966 = vmatpush1.msra.mxu0 0.0
    %967 = vmatprep.subr.mxu0 0.0
    %968 = vmatpush1.msra.mxu0 0.0
    %969 = vmatprep.subr.mxu0 0.0
    %970 = vmatpush1.msra.mxu0 0.0
    %971 = vmatprep.subr.mxu0 0.0
    %972 = vmatpush1.msra.mxu0 0.0
    %973 = vmatprep.subr.mxu0 0.0
    %974 = vmatpush1.msra.mxu0 0.0
    %975 = vmatprep.subr.mxu0 0.0
    %976 = vmatpush1.msra.mxu0 0.0
    %977 = vmatprep.subr.mxu0 0.0
    %978 = vmatpush1.msra.mxu0 0.0
    %979 = vmatprep.subr.mxu0 0.0
    %980 = vmatpush1.msra.mxu0 0.0
    %981 = vmatprep.subr.mxu0 0.0
    %982 = vmatpush1.msra.mxu0 0.0
    %983 = vmatprep.subr.mxu0 0.0
    %984 = vmatpush1.msra.mxu0 0.0
    %985 = vmatprep.subr.mxu0 0.0
    %986 = vmatpush1.msra.mxu0 0.0
    %987 = vmatprep.subr.mxu0 0.0
    %988 = vmatpush1.msra.mxu0 0.0
    %989 = vmatprep.subr.mxu0 0.0
    %990 = vmatpush1.msra.mxu0 0.0
    %991 = vmatprep.subr.mxu0 0.0
    %992 = vmatpush1.msra.mxu0 0.0
    %993 = vmatprep.subr.mxu0 0.0
    %994 = vmatpush1.msra.mxu0 0.0
    %995 = vmatprep.subr.mxu0 0.0
    %996 = vmatpush1.msra.mxu0 0.0
    %997 = vmatprep.subr.mxu0 0.0
    %998 = vmatpush1.msra.mxu0 0.0
    %999 = vmatprep.subr.mxu0 0.0
    %1000 = vmatpush1.msra.mxu0 0.0
    %1001 = vmatprep.subr.mxu0 0.0
    %1002 = vmatpush1.msra.mxu0 0.0
    %1003 = vmatprep.subr.mxu0 0.0
    %1004 = vmatpush1.msra.mxu0 0.0
    %1005 = vmatprep.subr.mxu0 0.0
    %1006 = vmatpush1.msra.mxu0 0.0
    %1007 = vmatprep.subr.mxu0 0.0
    %1008 = vmatpush1.msra.mxu0 0.0
    %1009 = vmatprep.subr.mxu0 0.0
    %1010 = vmatpush1.msra.mxu0 0.0
    %1011 = vmatprep.mubr.f32.mxu0 0.0
    %1012 = vmatmul.mubr.f32.gmra.mrb[0].mxu0 %v945
    %v1013 = vpop.f32.mrb[0].mxu0
    %v1014 = vadd.f32 %v943, %v1013
    %v1015 = vpop.f32.mrb[0].mxu0
    %1016 = vdwg.mxu0
    %v1017 = vmul.f32 %v1014, 0.5
    %v1018 = vmul.f32 %v1014, 0.70710677
    %v1019 = vand.u32 2147483647, %v1018
    %v1020 = vmul.f32 %v1019, 0.3275911
    %v1021 = vadd.f32 %v1020, 1.0
    %v1022 = vrcp.pop %v1021
    %v1023 = vmul.f32 1.0, %v1022
    %v1024 = vmul.f32 %v1023, 1.0614054
    %v1025 = vadd.f32 %v1024, -1.4531521
    %v1026 = vmul.f32 %v1025, %v1023
    %v1027 = vadd.f32 %v1026, 1.4214138
    %v1028 = vmul.f32 %v1027, %v1023
    %v1029 = vadd.f32 %v1028, -0.28449672
    %v1030 = vmul.f32 %v1029, %v1023
    %v1031 = vadd.f32 %v1030, 0.2548296
    %v1032 = vmul.f32 %v1031, %v1023
    %v1033 = vsub.f32 0.0, %v1019
    %v1034 = vmul.f32 %v1033, %v1019
    %v1035 = vmul.f32 %v1034, 1.442695
    %v1036 = vpow.pop %v1035
    %v1037 = vmul.f32 %v1032, %v1036
    %v1038 = vsub.f32 1.0, %v1037
    %vm1039 = vcmp.ge.f32.partialorder %v1018, 0.0
    %v1040 = vsub.f32 0.0, %v1038
    %v1041 = vsel %vm1039, %v1038, %v1040
    %v1042 = vadd.f32 %v1041, 1.0
    %v1043 = vmul.f32 %v1017, %v1042
    %v1044 = vlaneseq
    %v1045 = vshrl.u32 %v1044, 7
    %v1046 = vsub.s32 0, %v1045
    %v1047 = vrot.slane %v32, %v1046
    %vm1048 = vcmask 523264
    %v1050 = vsel %vm1048, %v1043, 0
    %1052 = vmatprep.subr.mxu0 0.0
    %1053 = vmatpush1.msra.mxu0 %v69
    %1054 = vmatprep.subr.mxu0 0.0
    %1055 = vmatpush1.msra.mxu0 %v70
    %1056 = vmatprep.subr.mxu0 0.0
    %1057 = vmatpush1.msra.mxu0 %v71
    %1058 = vmatprep.subr.mxu0 0.0
    %1059 = vmatpush1.msra.mxu0 %v72
    %1060 = vmatprep.subr.mxu0 0.0
    %1061 = vmatpush1.msra.mxu0 %v73
    %1062 = vmatprep.subr.mxu0 0.0
    %1063 = vmatpush1.msra.mxu0 %v74
    %1064 = vmatprep.subr.mxu0 0.0
    %1065 = vmatpush1.msra.mxu0 %v75
    %1066 = vmatprep.subr.mxu0 0.0
    %1067 = vmatpush1.msra.mxu0 %v76
    %1068 = vmatprep.subr.mxu0 0.0
    %1069 = vmatpush1.msra.mxu0 0.0
    %1070 = vmatprep.subr.mxu0 0.0
    %1071 = vmatpush1.msra.mxu0 0.0
    %1072 = vmatprep.subr.mxu0 0.0
    %1073 = vmatpush1.msra.mxu0 0.0
    %1074 = vmatprep.subr.mxu0 0.0
    %1075 = vmatpush1.msra.mxu0 0.0
    %1076 = vmatprep.subr.mxu0 0.0
    %1077 = vmatpush1.msra.mxu0 0.0
    %1078 = vmatprep.subr.mxu0 0.0
    %1079 = vmatpush1.msra.mxu0 0.0
    %1080 = vmatprep.subr.mxu0 0.0
    %1081 = vmatpush1.msra.mxu0 0.0
    %1082 = vmatprep.subr.mxu0 0.0
    %1083 = vmatpush1.msra.mxu0 0.0
    %1084 = vmatprep.subr.mxu0 0.0
    %1085 = vmatpush1.msra.mxu0 0.0
    %1086 = vmatprep.subr.mxu0 0.0
    %1087 = vmatpush1.msra.mxu0 0.0
    %1088 = vmatprep.subr.mxu0 0.0
    %1089 = vmatpush1.msra.mxu0 0.0
    %1090 = vmatprep.subr.mxu0 0.0
    %1091 = vmatpush1.msra.mxu0 0.0
    %1092 = vmatprep.subr.mxu0 0.0
    %1093 = vmatpush1.msra.mxu0 0.0
    %1094 = vmatprep.subr.mxu0 0.0
    %1095 = vmatpush1.msra.mxu0 0.0
    %1096 = vmatprep.subr.mxu0 0.0
    %1097 = vmatpush1.msra.mxu0 0.0
    %1098 = vmatprep.subr.mxu0 0.0
    %1099 = vmatpush1.msra.mxu0 0.0
    %1100 = vmatprep.subr.mxu0 0.0
    %1101 = vmatpush1.msra.mxu0 0.0
    %1102 = vmatprep.subr.mxu0 0.0
    %1103 = vmatpush1.msra.mxu0 0.0
    %1104 = vmatprep.subr.mxu0 0.0
    %1105 = vmatpush1.msra.mxu0 0.0
    %1106 = vmatprep.subr.mxu0 0.0
    %1107 = vmatpush1.msra.mxu0 0.0
    %1108 = vmatprep.subr.mxu0 0.0
    %1109 = vmatpush1.msra.mxu0 0.0
    %1110 = vmatprep.subr.mxu0 0.0
    %1111 = vmatpush1.msra.mxu0 0.0
    %1112 = vmatprep.subr.mxu0 0.0
    %1113 = vmatpush1.msra.mxu0 0.0
    %1114 = vmatprep.subr.mxu0 0.0
    %1115 = vmatpush1.msra.mxu0 0.0
    %1116 = vmatprep.mubr.f32.mxu0 0.0
    %1117 = vmatmul.mubr.f32.gmra.mrb[0].mxu0 %v1050
    %v1118 = vpop.f32.mrb[0].mxu0
    %v1119 = vadd.f32 %v1047, %v1118
    %v1120 = vpop.f32.mrb[0].mxu0
    %1121 = vdwg.mxu0
    %v1122 = vadd.f32 %v915, %v1119
    %v1123 = vld [vmem:[%s1] sm:$0x3f]
    %v1125 = vcombine.high %v1123, %v1123
    %v1127 = vunpack.c.l.s4 1983009808
    %v1128 = vunpack.c.0.s8 %v1127
    %v1129 = vlaneseq
    %v1130 = vshrl.u32 %v1129, 7
    %v1131 = vsub.s32 %v1128, %v1130
    %v1132 = vrot.slane %v1123, %v1131
    %v1134 = vunpack.c.l.s4 1983009808
    %v1135 = vunpack.c.0.s8 %v1134
    %v1136 = vlaneseq
    %v1137 = vshrl.u32 %v1136, 7
    %v1138 = vsub.s32 %v1135, %v1137
    %v1139 = vrot.slane %v1125, %v1138
    %v1140 = vcombine.high %v1132, %v1132
    %v1143 = vsel %vm129, %v1139, 0
    %1145 = vmatprep.subr.mxu0 0.0
    %1146 = vmatpush1.msra.mxu0 %v77
    %1147 = vmatprep.subr.mxu0 0.0
    %1148 = vmatpush1.msra.mxu0 %v78
    %1149 = vmatprep.subr.mxu0 0.0
    %1150 = vmatpush1.msra.mxu0 %v79
    %1151 = vmatprep.subr.mxu0 0.0
    %1152 = vmatpush1.msra.mxu0 %v80
    %1153 = vmatprep.subr.mxu0 0.0
    %1154 = vmatpush1.msra.mxu0 %v81
    %1155 = vmatprep.subr.mxu0 0.0
    %1156 = vmatpush1.msra.mxu0 %v82
    %1157 = vmatprep.subr.mxu0 0.0
    %1158 = vmatpush1.msra.mxu0 %v83
    %1159 = vmatprep.subr.mxu0 0.0
    %1160 = vmatpush1.msra.mxu0 %v84
    %1161 = vmatprep.subr.mxu0 0.0
    %1162 = vmatpush1.msra.mxu0 %v85
    %1163 = vmatprep.subr.mxu0 0.0
    %1164 = vmatpush1.msra.mxu0 %v86
    %1165 = vmatprep.subr.mxu0 0.0
    %1166 = vmatpush1.msra.mxu0 %v87
    %1167 = vmatprep.subr.mxu0 0.0
    %1168 = vmatpush1.msra.mxu0 %v88
    %1169 = vmatprep.subr.mxu0 0.0
    %1170 = vmatpush1.msra.mxu0 %v89
    %1171 = vmatprep.subr.mxu0 0.0
    %1172 = vmatpush1.msra.mxu0 %v90
    %1173 = vmatprep.subr.mxu0 0.0
    %1174 = vmatpush1.msra.mxu0 %v91
    %1175 = vmatprep.subr.mxu0 0.0
    %1176 = vmatpush1.msra.mxu0 %v92
    %1177 = vmatprep.subr.mxu0 0.0
    %1178 = vmatpush1.msra.mxu0 %v93
    %1179 = vmatprep.subr.mxu0 0.0
    %1180 = vmatpush1.msra.mxu0 %v94
    %1181 = vmatprep.subr.mxu0 0.0
    %1182 = vmatpush1.msra.mxu0 %v95
    %1183 = vmatprep.subr.mxu0 0.0
    %1184 = vmatpush1.msra.mxu0 %v96
    %1185 = vmatprep.subr.mxu0 0.0
    %1186 = vmatpush1.msra.mxu0 %v97
    %1187 = vmatprep.subr.mxu0 0.0
    %1188 = vmatpush1.msra.mxu0 %v98
    %1189 = vmatprep.subr.mxu0 0.0
    %1190 = vmatpush1.msra.mxu0 %v99
    %1191 = vmatprep.subr.mxu0 0.0
    %1192 = vmatpush1.msra.mxu0 %v100
    %1193 = vmatprep.subr.mxu0 0.0
    %1194 = vmatpush1.msra.mxu0 %v101
    %1195 = vmatprep.subr.mxu0 0.0
    %1196 = vmatpush1.msra.mxu0 %v102
    %1197 = vmatprep.subr.mxu0 0.0
    %1198 = vmatpush1.msra.mxu0 %v103
    %1199 = vmatprep.subr.mxu0 0.0
    %1200 = vmatpush1.msra.mxu0 %v104
    %1201 = vmatprep.subr.mxu0 0.0
    %1202 = vmatpush1.msra.mxu0 %v105
    %1203 = vmatprep.subr.mxu0 0.0
    %1204 = vmatpush1.msra.mxu0 %v106
    %1205 = vmatprep.subr.mxu0 0.0
    %1206 = vmatpush1.msra.mxu0 %v107
    %1207 = vmatprep.subr.mxu0 0.0
    %1208 = vmatpush1.msra.mxu0 %v108
    %1209 = vmatprep.mubr.f32.mxu0 %v1140
    %1210 = vmatmul.mubr.f32.gmra.mrb[0].mxu0 %v1132
    %v1211 = vpop.f32.mrb[0].mxu0
    %v1212 = vadd.f32 0.0, %v1211
    %v1213 = vpop.f32.mrb[0].mxu0
    %1214 = vdwg.mxu0
    %1215 = vmatprep.subr.mxu0 0.0
    %1216 = vmatpush1.msra.mxu0 %v109
    %1217 = vmatprep.subr.mxu0 0.0
    %1218 = vmatpush1.msra.mxu0 %v110
    %1219 = vmatprep.subr.mxu0 0.0
    %1220 = vmatpush1.msra.mxu0 %v111
    %1221 = vmatprep.subr.mxu0 0.0
    %1222 = vmatpush1.msra.mxu0 %v112
    %1223 = vmatprep.subr.mxu0 0.0
    %1224 = vmatpush1.msra.mxu0 0.0
    %1225 = vmatprep.subr.mxu0 0.0
    %1226 = vmatpush1.msra.mxu0 0.0
    %1227 = vmatprep.subr.mxu0 0.0
    %1228 = vmatpush1.msra.mxu0 0.0
    %1229 = vmatprep.subr.mxu0 0.0
    %1230 = vmatpush1.msra.mxu0 0.0
    %1231 = vmatprep.subr.mxu0 0.0
    %1232 = vmatpush1.msra.mxu0 0.0
    %1233 = vmatprep.subr.mxu0 0.0
    %1234 = vmatpush1.msra.mxu0 0.0
    %1235 = vmatprep.subr.mxu0 0.0
    %1236 = vmatpush1.msra.mxu0 0.0
    %1237 = vmatprep.subr.mxu0 0.0
    %1238 = vmatpush1.msra.mxu0 0.0
    %1239 = vmatprep.subr.mxu0 0.0
    %1240 = vmatpush1.msra.mxu0 0.0
    %1241 = vmatprep.subr.mxu0 0.0
    %1242 = vmatpush1.msra.mxu0 0.0
    %1243 = vmatprep.subr.mxu0 0.0
    %1244 = vmatpush1.msra.mxu0 0.0
    %1245 = vmatprep.subr.mxu0 0.0
    %1246 = vmatpush1.msra.mxu0 0.0
    %1247 = vmatprep.subr.mxu0 0.0
    %1248 = vmatpush1.msra.mxu0 0.0
    %1249 = vmatprep.subr.mxu0 0.0
    %1250 = vmatpush1.msra.mxu0 0.0
    %1251 = vmatprep.subr.mxu0 0.0
    %1252 = vmatpush1.msra.mxu0 0.0
    %1253 = vmatprep.subr.mxu0 0.0
    %1254 = vmatpush1.msra.mxu0 0.0
    %1255 = vmatprep.subr.mxu0 0.0
    %1256 = vmatpush1.msra.mxu0 0.0
    %1257 = vmatprep.subr.mxu0 0.0
    %1258 = vmatpush1.msra.mxu0 0.0
    %1259 = vmatprep.subr.mxu0 0.0
    %1260 = vmatpush1.msra.mxu0 0.0
    %1261 = vmatprep.subr.mxu0 0.0
    %1262 = vmatpush1.msra.mxu0 0.0
    %1263 = vmatprep.subr.mxu0 0.0
    %1264 = vmatpush1.msra.mxu0 0.0
    %1265 = vmatprep.subr.mxu0 0.0
    %1266 = vmatpush1.msra.mxu0 0.0
    %1267 = vmatprep.subr.mxu0 0.0
    %1268 = vmatpush1.msra.mxu0 0.0
    %1269 = vmatprep.subr.mxu0 0.0
    %1270 = vmatpush1.msra.mxu0 0.0
    %1271 = vmatprep.subr.mxu0 0.0
    %1272 = vmatpush1.msra.mxu0 0.0
    %1273 = vmatprep.subr.mxu0 0.0
    %1274 = vmatpush1.msra.mxu0 0.0
    %1275 = vmatprep.subr.mxu0 0.0
    %1276 = vmatpush1.msra.mxu0 0.0
    %1277 = vmatprep.subr.mxu0 0.0
    %1278 = vmatpush1.msra.mxu0 0.0
    %1279 = vmatprep.mubr.f32.mxu0 0.0
    %1280 = vmatmul.mubr.f32.gmra.mrb[0].mxu0 %v1143
    %v1281 = vpop.f32.mrb[0].mxu0
    %v1282 = vadd.f32 %v1212, %v1281
    %v1283 = vpop.f32.mrb[0].mxu0
    %1284 = vdwg.mxu0
    %v1285 = vadd.f32 %v1122, %v1282
    %v1286 = vsel %vm916, %v1285, 0.0
    %1287 = vadd.xlane.f32.xlu0 %v1286
    %v1288 = vpop.xlane.xlu0 %1287
    %v1289 = vmul.f32 %v1288, %v142
    %v1290 = vsub.f32 %v1285, %v1289
    %v1291 = vmul.f32 %v1290, %v1290
    %v1292 = vsel %vm916, %v1291, 0.0
    %1293 = vadd.xlane.f32.xlu0 %v1292
    %v1294 = vpop.xlane.xlu0 %1293
    %v1295 = vmul.f32 %v1294, %v142
    %v1296 = vadd.f32 %v1295, 1e-06
    %v1297 = vrsqrt.pop %v1296
    %v1298 = vmul.f32 %v1290, %v1297
    %v1299 = vlaneseq
    %v1300 = vshrl.u32 %v1299, 7
    %v1301 = vsub.s32 0, %v1300
    %v1302 = vrot.slane %v33, %v1301
    %v1303 = vmul.f32 %v1298, %v1302
    %v1304 = vlaneseq
    %v1305 = vshrl.u32 %v1304, 7
    %v1306 = vsub.s32 0, %v1305
    %v1307 = vrot.slane %v34, %v1306
    %v1308 = vadd.f32 %v1303, %v1307
    %v1309 = vlaneseq
    %v1310 = vshrl.u32 %v1309, 7
    %v1311 = vsub.s32 0, %v1310
    %v1312 = vrot.slane %v35, %v1311
    %1321 = vrot.lane.b32.xlu0 %v61, 64
    %v1322 = vpop.permute.xlu0 %1321
    %1323 = vrot.lane.b32.xlu0 %v62, 64
    %v1324 = vpop.permute.xlu0 %1323
    %1325 = vrot.lane.b32.xlu0 %v63, 64
    %v1326 = vpop.permute.xlu0 %1325
    %1327 = vrot.lane.b32.xlu0 %v64, 64
    %v1328 = vpop.permute.xlu0 %1327
    %1329 = vrot.lane.b32.xlu0 %v65, 64
    %v1330 = vpop.permute.xlu0 %1329
    %1331 = vrot.lane.b32.xlu0 %v66, 64
    %v1332 = vpop.permute.xlu0 %1331
    %1333 = vrot.lane.b32.xlu0 %v67, 64
    %v1334 = vpop.permute.xlu0 %1333
    %1335 = vrot.lane.b32.xlu0 %v68, 64
    %v1336 = vpop.permute.xlu0 %1335
    %v1337 = vsel %vm1048, %v1322, %v1324
    %v1338 = vsel %vm1048, %v1326, %v1328
    %v1339 = vsel %vm1048, %v1330, %v1332
    %v1340 = vsel %vm1048, %v1334, %v1336
    %v1346 = vsel %vm129, %v1308, 0
    %1348 = vmatprep.subr.mxu0 0.0
    %1349 = vmatpush1.msra.mxu0 %v1337
    %1350 = vmatprep.subr.mxu0 0.0
    %1351 = vmatpush1.msra.mxu0 %v1338
    %1352 = vmatprep.subr.mxu0 0.0
    %1353 = vmatpush1.msra.mxu0 %v1339
    %1354 = vmatprep.subr.mxu0 0.0
    %1355 = vmatpush1.msra.mxu0 %v1340
    %1356 = vmatprep.subr.mxu0 0.0
    %1357 = vmatpush1.msra.mxu0 0.0
    %1358 = vmatprep.subr.mxu0 0.0
    %1359 = vmatpush1.msra.mxu0 0.0
    %1360 = vmatprep.subr.mxu0 0.0
    %1361 = vmatpush1.msra.mxu0 0.0
    %1362 = vmatprep.subr.mxu0 0.0
    %1363 = vmatpush1.msra.mxu0 0.0
    %1364 = vmatprep.subr.mxu0 0.0
    %1365 = vmatpush1.msra.mxu0 0.0
    %1366 = vmatprep.subr.mxu0 0.0
    %1367 = vmatpush1.msra.mxu0 0.0
    %1368 = vmatprep.subr.mxu0 0.0
    %1369 = vmatpush1.msra.mxu0 0.0
    %1370 = vmatprep.subr.mxu0 0.0
    %1371 = vmatpush1.msra.mxu0 0.0
    %1372 = vmatprep.subr.mxu0 0.0
    %1373 = vmatpush1.msra.mxu0 0.0
    %1374 = vmatprep.subr.mxu0 0.0
    %1375 = vmatpush1.msra.mxu0 0.0
    %1376 = vmatprep.subr.mxu0 0.0
    %1377 = vmatpush1.msra.mxu0 0.0
    %1378 = vmatprep.subr.mxu0 0.0
    %1379 = vmatpush1.msra.mxu0 0.0
    %1380 = vmatprep.subr.mxu0 0.0
    %1381 = vmatpush1.msra.mxu0 0.0
    %1382 = vmatprep.subr.mxu0 0.0
    %1383 = vmatpush1.msra.mxu0 0.0
    %1384 = vmatprep.subr.mxu0 0.0
    %1385 = vmatpush1.msra.mxu0 0.0
    %1386 = vmatprep.subr.mxu0 0.0
    %1387 = vmatpush1.msra.mxu0 0.0
    %1388 = vmatprep.subr.mxu0 0.0
    %1389 = vmatpush1.msra.mxu0 0.0
    %1390 = vmatprep.subr.mxu0 0.0
    %1391 = vmatpush1.msra.mxu0 0.0
    %1392 = vmatprep.subr.mxu0 0.0
    %1393 = vmatpush1.msra.mxu0 0.0
    %1394 = vmatprep.subr.mxu0 0.0
    %1395 = vmatpush1.msra.mxu0 0.0
    %1396 = vmatprep.subr.mxu0 0.0
    %1397 = vmatpush1.msra.mxu0 0.0
    %1398 = vmatprep.subr.mxu0 0.0
    %1399 = vmatpush1.msra.mxu0 0.0
    %1400 = vmatprep.subr.mxu0 0.0
    %1401 = vmatpush1.msra.mxu0 0.0
    %1402 = vmatprep.subr.mxu0 0.0
    %1403 = vmatpush1.msra.mxu0 0.0
    %1404 = vmatprep.subr.mxu0 0.0
    %1405 = vmatpush1.msra.mxu0 0.0
    %1406 = vmatprep.subr.mxu0 0.0
    %1407 = vmatpush1.msra.mxu0 0.0
    %1408 = vmatprep.subr.mxu0 0.0
    %1409 = vmatpush1.msra.mxu0 0.0
    %1410 = vmatprep.subr.mxu0 0.0
    %1411 = vmatpush1.msra.mxu0 0.0
    %1412 = vmatprep.mubr.f32.mxu0 0.0
    %1413 = vmatmul.mubr.f32.gmra.mrb[0].mxu0 %v1346
    %v1414 = vpop.f32.mrb[0].mxu0
    %v1415 = vadd.f32 %v1312, %v1414
    %v1416 = vpop.f32.mrb[0].mxu0
    %1417 = vdwg.mxu0
    %1418 = vst [vmem:[#allocation2] sm:$0x3] %v1415
    // Predicated region
    $region22: #{model_forward.1} parent=1 // pred_check
      _
    $region23: #{model_forward.1} parent=1 // pred_check_branch
      %1420 = sbr.rel (0) target = $region25
    $region24: #{model_forward.1} parent=1 // pred_region
      %s1422 = ssub.s32 32, 32
      %1423 = vsyncadd [#allocation3], %s1422
      %s1425 = sshll.u32 [#allocation2], 4
      %s1426 = int_to_ptr.vmem [resolvable:$true] %s1425
      %1428 = dma.vmem_to_hbm [thread:$0]  %s1426, 32, %s5, [#allocation3]
    $region25: #{model_forward.1} parent=1 // pred_fallthru
      _
    // Predicated region
    $region26: #{model_forward.1} parent=1 // pred_check
      _
    $region27: #{model_forward.1} parent=1 // pred_check_branch
      %1430 = sbr.rel (0) target = $region29
    $region28: #{model_forward.1} parent=1 // pred_region
      %1431 = dma.done [#allocation3], 32
    $region29: #{model_forward.1} parent=1 // pred_fallthru
      _
    %1432 = vsyncpa [#allocation3], 1

</llo_original>
